<compile_context>
chip_gen: v5e
topology: v5e:2x2
jax: 0.10.0
libtpu: 0.0.40
codegen_flags: <defaults>
</compile_context>

<pallas_src>
import functools

import jax
import jax.numpy as jnp
from jax.experimental import pallas as pl
from jax.experimental.pallas import tpu as pltpu

BN_EPS = 1e-5
LEAKY_SLOPE = 0.1


def _round_up(n, m):
    return ((n + m - 1) // m) * m


# --------------------------------------------------------------------------
# Kernel 1: Linear(1024 -> 128) + per-tile partial BN statistics.
# --------------------------------------------------------------------------
def linear1_stats_kernel(x_ref, w1_ref, h_ref, stats_ref):
    # bf16 MXU inputs, f32 accumulation.
    h = jnp.dot(x_ref[...].astype(jnp.bfloat16), w1_ref[...],
                preferred_element_type=jnp.float32)          # [tb, 128] f32
    h_ref[...] = h
    # Partial statistics summed over this tile's rows (zero-padded rows add 0).
    s = jnp.sum(h, axis=0, keepdims=True)                    # [1, 128]
    sq = jnp.sum(h * h, axis=0, keepdims=True)               # [1, 128]
    stats_ref[...] = jnp.concatenate([s, sq], axis=0)[None]  # [1, 2, 128]


# --------------------------------------------------------------------------
# Kernel 2: folded BatchNorm (scale/shift) -> LeakyReLU -> Linear(128 -> n_cat).
# --------------------------------------------------------------------------
def bn_lrelu_linear2_kernel(h_ref, scale_ref, shift_ref, w2_ref, b2_ref, out_ref):
    h_bn = h_ref[...] * scale_ref[...] + shift_ref[...]
    a = jnp.maximum(h_bn, LEAKY_SLOPE * h_bn)                # LeakyReLU, slope in (0,1)
    out_ref[...] = jnp.dot(a.astype(jnp.bfloat16), w2_ref[...],
                           preferred_element_type=jnp.float32) + b2_ref[...]


@functools.partial(jax.jit, static_argnames=("n_cat", "tile_b"))
def qnet_categorical_forward(x, params, n_cat, tile_b=512):
    """x: [B, 1024] float32 -> logits [B, n_cat] float32 (train-mode BN)."""
    w1, _b1_unused, gamma, beta, w2, b2 = params
    # b1 is mathematically cancelled by the train-mode batch-mean subtraction.

    B = x.shape[0]
    n_cat_pad = w2.shape[1]

    # Batch tiling (sublane-aligned); pad batch to a tile multiple with zeros.
    tb = _round_up(min(int(tile_b), _round_up(B, 8)), 8)
    b_pad = _round_up(B, tb)
    nbt = b_pad // tb
    if b_pad != B:
        x = jnp.pad(x, ((0, b_pad - B), (0, 0)))

    cparams = pltpu.CompilerParams(
        dimension_semantics=("parallel",),      # megacore-shard batch tiles on v7x
        vmem_limit_bytes=32 * 1024 * 1024,
    )

    # ---- Phase 1: h = x @ w1 and per-tile partial stats --------------------
    h, part = pl.pallas_call(
        linear1_stats_kernel,
        out_shape=(jax.ShapeDtypeStruct((b_pad, 128), jnp.float32),
                   jax.ShapeDtypeStruct((nbt, 2, 128), jnp.float32)),
        grid=(nbt,),
        in_specs=[pl.BlockSpec((tb, 1024), lambda i: (i, 0)),
                  pl.BlockSpec((1024, 128), lambda i: (0, 0))],
        out_specs=(pl.BlockSpec((tb, 128), lambda i: (i, 0)),
                   pl.BlockSpec((1, 2, 128), lambda i: (i, 0, 0))),
        compiler_params=cparams,
    )(x, w1)

    # ---- Fold BN into one scale/shift (tiny [128]-sized math, true batch B) ----
    sums = jnp.sum(part, axis=0)                              # [2, 128]
    mean = sums[0:1] / B                                      # [1, 128]
    var = jnp.maximum(sums[1:2] / B - mean * mean, 0.0)       # biased (train-mode)
    inv_std = jax.lax.rsqrt(var + BN_EPS)
    scale = gamma * inv_std
    shift = beta - mean * scale

    # ---- Phase 2: normalize -> LeakyReLU -> second Linear -------------------
    out = pl.pallas_call(
        bn_lrelu_linear2_kernel,
        out_shape=jax.ShapeDtypeStruct((b_pad, n_cat_pad), jnp.float32),
        grid=(nbt,),
        in_specs=[pl.BlockSpec((tb, 128), lambda i: (i, 0)),
                  pl.BlockSpec((1, 128), lambda i: (0, 0)),
                  pl.BlockSpec((1, 128), lambda i: (0, 0)),
                  pl.BlockSpec((128, n_cat_pad), lambda i: (0, 0)),
                  pl.BlockSpec((1, n_cat_pad), lambda i: (0, 0))],
        out_specs=pl.BlockSpec((tb, n_cat_pad), lambda i: (i, 0)),
        compiler_params=cparams,
    )(h, scale, shift, w2, b2)

    return out[:B, :n_cat]


def init_params(n_cat, key):
    """Deterministic synthetic parameters matching nn.Linear / BatchNorm1d shapes."""
    k1, k2, k3, k4, k5, k6 = jax.random.split(key, 6)
    n_cat_pad = max(128, _round_up(n_cat, 128))

    # Linear(1024, 128), stored [in, out]; weights kept in bf16 (halves weight DMA).
    lim1 = 1.0 / jnp.sqrt(1024.0)
    w1 = jax.random.uniform(k1, (1024, 128), jnp.float32, -lim1, lim1).astype(jnp.bfloat16)
    b1 = jax.random.uniform(k2, (1, 128), jnp.float32, -lim1, lim1)

    # BatchNorm1d(128) affine params (perturbed from 1/0 so the test exercises them).
    gamma = 1.0 + 0.1 * jax.random.normal(k5, (1, 128), jnp.float32)
    beta = 0.1 * jax.random.normal(k6, (1, 128), jnp.float32)

    # Linear(128, n_cat), stored [in, out], zero-padded to n_cat_pad lanes.
    lim2 = 1.0 / jnp.sqrt(128.0)
    w2_core = jax.random.uniform(k3, (128, n_cat), jnp.float32, -lim2, lim2)
    b2_core = jax.random.uniform(k4, (1, n_cat), jnp.float32, -lim2, lim2)
    w2 = jnp.zeros((128, n_cat_pad), jnp.float32).at[:, :n_cat].set(w2_core).astype(jnp.bfloat16)
    b2 = jnp.zeros((1, n_cat_pad), jnp.float32).at[:, :n_cat].set(b2_core)

    return (w1, b1, gamma, beta, w2, b2)


def reference_forward(x, params, n_cat):
    """Pure-f32 JAX mirror of the PyTorch forward (train-mode BN, biased variance)."""
    w1, b1, gamma, beta, w2, b2 = params
    h = x @ w1.astype(jnp.float32) + b1
    mean = jnp.mean(h, axis=0, keepdims=True)
    var = jnp.mean((h - mean) ** 2, axis=0, keepdims=True)
    h = (h - mean) * jax.lax.rsqrt(var + BN_EPS) * gamma + beta
    a = jnp.where(h >= 0.0, h, LEAKY_SLOPE * h)
    return (a @ w2.astype(jnp.float32) + b2)[:, :n_cat]


def reference_forward_matched(x, params, n_cat):
    """Mirror of the kernel's exact numerics (bf16 MXU inputs, folded BN, no b1)."""
    w1, _b1, gamma, beta, w2, b2 = params
    B = x.shape[0]
    h = jnp.dot(x.astype(jnp.bfloat16), w1, preferred_element_type=jnp.float32)
    mean = jnp.sum(h, axis=0, keepdims=True) / B
    var = jnp.maximum(jnp.sum(h * h, axis=0, keepdims=True) / B - mean * mean, 0.0)
    scale = gamma * jax.lax.rsqrt(var + BN_EPS)
    shift = beta - mean * scale
    h_bn = h * scale + shift
    a = jnp.maximum(h_bn, LEAKY_SLOPE * h_bn)
    logits = jnp.dot(a.astype(jnp.bfloat16), w2, preferred_element_type=jnp.float32) + b2
    return logits[:, :n_cat]


if __name__ == "__main__":
    key = jax.random.PRNGKey(0)
    k_param, k_x = jax.random.split(key)

    n_cat = 10
    batch = 200  # not a tile multiple -> exercises batch padding; BN needs batch > 1
    params = init_params(n_cat, k_param)
    x = jax.random.normal(k_x, (batch, 1024), jnp.float32)

    # tile_b=128 -> 2 batch tiles, exercising the grid / global-BN two-phase path.
    logits = qnet_categorical_forward(x, params, n_cat=n_cat, tile_b=128)
    jax.block_until_ready(logits)
    assert logits.shape == (batch, n_cat)

    # Tight check against a reference that mirrors the kernel's numerics exactly.
    ref_m = reference_forward_matched(x, params, n_cat)
    assert jnp.allclose(logits, ref_m, atol=1e-3, rtol=1e-3), "mismatch vs matched reference"

    # Looser check against the pure-f32 PyTorch-style reference (difference is
    # only bf16 rounding of the MXU inputs; accumulation is f32).
    ref = reference_forward(x, params, n_cat)
    assert jnp.allclose(logits, ref, atol=5e-2, rtol=5e-2), "mismatch vs f32 reference"

    # TODO(synk): BatchNorm1d running-mean/var (momentum) buffer updates are a
    # training-side effect and are not produced here (forward logits only).

    print("KERNEL_OK")
</pallas_src>

<mosaic_0001>
module attributes {stable_mosaic.version = 11 : i64} {
  func.func @linear1_stats_kernel(%arg0: i32, %arg1: memref<128x1024xf32, #tpu.memory_space<vmem>>, %arg2: memref<1024x128xbf16, #tpu.memory_space<vmem>>, %arg3: memref<128x128xf32, #tpu.memory_space<vmem>>, %arg4: memref<1x2x128xf32, #tpu.memory_space<vmem>>) attributes {dimension_semantics = [#tpu.dimension_semantics<parallel>], iteration_bounds = array<i64: 2>, scalar_prefetch = 0 : i64, scratch_operands = 0 : i64, tpu.core_type = #tpu.core_type<tc>, window_params = [{transform_indices = @transform_0, window_bounds = array<i64: 128, 1024>}, {pipeline_mode = #tpu.pipeline_mode<synchronous>, transform_indices = @transform_1, window_bounds = array<i64: 1024, 128>}, {transform_indices = @transform_2, window_bounds = array<i64: 128, 128>}, {transform_indices = @transform_3, window_bounds = array<i64: 1, 2, 128>}]} {
    %c0 = arith.constant 0 : index
    %c0_0 = arith.constant 0 : index
    %0 = vector.load %arg1[%c0, %c0_0] : memref<128x1024xf32, #tpu.memory_space<vmem>>, vector<128x1024xf32>
    %1 = arith.truncf %0 : vector<128x1024xf32> to vector<128x1024xbf16>
    %c0_1 = arith.constant 0 : index
    %c0_2 = arith.constant 0 : index
    %2 = vector.load %arg2[%c0_1, %c0_2] : memref<1024x128xbf16, #tpu.memory_space<vmem>>, vector<1024x128xbf16>
    %cst = arith.constant dense<0.000000e+00> : vector<128x128xf32>
    %3 = tpu.matmul %1, %2, %cst {dimension_numbers = #tpu.dot_dimension_numbers<[1], [0], [0], [1], [0, 0, 1, 1], [], []>} : vector<128x1024xbf16>, vector<1024x128xbf16>, vector<128x128xf32> -> vector<128x128xf32>
    %c0_3 = arith.constant 0 : index
    %c0_4 = arith.constant 0 : index
    %4 = vector.load %arg3[%c0_3, %c0_4] : memref<128x128xf32, #tpu.memory_space<vmem>>, vector<128x128xf32>
    tpu.vector_store %arg3[%c0_3, %c0_4], %3 {strides = array<i32>} : memref<128x128xf32, #tpu.memory_space<vmem>>, vector<128x128xf32>,
    %cst_5 = arith.constant dense<0.000000e+00> : vector<128xf32>
    %5 = vector.multi_reduction <add>, %3, %cst_5 [0] : vector<128x128xf32> to vector<128xf32>
    %6 = vector.shape_cast %5 : vector<128xf32> to vector<1x128xf32>
    %7 = arith.mulf %3, %3 : vector<128x128xf32>
    %cst_6 = arith.constant dense<0.000000e+00> : vector<128xf32>
    %8 = vector.multi_reduction <add>, %7, %cst_6 [0] : vector<128x128xf32> to vector<128xf32>
    %9 = vector.shape_cast %8 : vector<128xf32> to vector<1x128xf32>
    %10 = tpu.concatenate %6, %9 in 0 : vector<1x128xf32>, vector<1x128xf32> -> vector<2x128xf32>
    %11 = vector.shape_cast %10 : vector<2x128xf32> to vector<1x2x128xf32>
    %c0_7 = arith.constant 0 : index
    %c0_8 = arith.constant 0 : index
    %c0_9 = arith.constant 0 : index
    %12 = vector.load %arg4[%c0_7, %c0_8, %c0_9] : memref<1x2x128xf32, #tpu.memory_space<vmem>>, vector<1x2x128xf32>
    tpu.vector_store %arg4[%c0_7, %c0_8, %c0_9], %11 {strides = array<i32>} : memref<1x2x128xf32, #tpu.memory_space<vmem>>, vector<1x2x128xf32>,
    return
  }
  func.func @transform_0(%arg0: i32) -> (i32, i32) {
    %c0_i32 = arith.constant 0 : i32
    %c0_i32_0 = arith.constant 0 : i32
    return %arg0, %c0_i32 : i32, i32
  }
  func.func @transform_1(%arg0: i32) -> (i32, i32) {
    %c0_i32 = arith.constant 0 : i32
    %c0_i32_0 = arith.constant 0 : i32
    %c0_i32_1 = arith.constant 0 : i32
    return %c0_i32, %c0_i32_0 : i32, i32
  }
  func.func @transform_2(%arg0: i32) -> (i32, i32) {
    %c0_i32 = arith.constant 0 : i32
    %c0_i32_0 = arith.constant 0 : i32
    return %arg0, %c0_i32 : i32, i32
  }
  func.func @transform_3(%arg0: i32) -> (i32, i32, i32) {
    %c0_i32 = arith.constant 0 : i32
    %c0_i32_0 = arith.constant 0 : i32
    %c0_i32_1 = arith.constant 0 : i32
    return %arg0, %c0_i32, %c0_i32_0 : i32, i32, i32
  }
}

module attributes {stable_mosaic.version = 11 : i64} {
  func.func @bn_lrelu_linear2_kernel(%arg0: i32, %arg1: memref<128x128xf32, #tpu.memory_space<vmem>>, %arg2: memref<1x128xf32, #tpu.memory_space<vmem>>, %arg3: memref<1x128xf32, #tpu.memory_space<vmem>>, %arg4: memref<128x128xbf16, #tpu.memory_space<vmem>>, %arg5: memref<1x128xf32, #tpu.memory_space<vmem>>, %arg6: memref<128x128xf32, #tpu.memory_space<vmem>>) attributes {dimension_semantics = [#tpu.dimension_semantics<parallel>], iteration_bounds = array<i64: 2>, scalar_prefetch = 0 : i64, scratch_operands = 0 : i64, tpu.core_type = #tpu.core_type<tc>, window_params = [{transform_indices = @transform_0, window_bounds = array<i64: 128, 128>}, {pipeline_mode = #tpu.pipeline_mode<synchronous>, transform_indices = @transform_1, window_bounds = array<i64: 1, 128>}, {pipeline_mode = #tpu.pipeline_mode<synchronous>, transform_indices = @transform_2, window_bounds = array<i64: 1, 128>}, {pipeline_mode = #tpu.pipeline_mode<synchronous>, transform_indices = @transform_3, window_bounds = array<i64: 128, 128>}, {pipeline_mode = #tpu.pipeline_mode<synchronous>, transform_indices = @transform_4, window_bounds = array<i64: 1, 128>}, {transform_indices = @transform_5, window_bounds = array<i64: 128, 128>}]} {
    %c0 = arith.constant 0 : index
    %c0_0 = arith.constant 0 : index
    %0 = vector.load %arg1[%c0, %c0_0] : memref<128x128xf32, #tpu.memory_space<vmem>>, vector<128x128xf32>
    %c0_1 = arith.constant 0 : index
    %c0_2 = arith.constant 0 : index
    %1 = vector.load %arg2[%c0_1, %c0_2] : memref<1x128xf32, #tpu.memory_space<vmem>>, vector<1x128xf32>
    %2 = vector.broadcast %1 : vector<1x128xf32> to vector<128x128xf32>
    %3 = arith.mulf %0, %2 : vector<128x128xf32>
    %c0_3 = arith.constant 0 : index
    %c0_4 = arith.constant 0 : index
    %4 = vector.load %arg3[%c0_3, %c0_4] : memref<1x128xf32, #tpu.memory_space<vmem>>, vector<1x128xf32>
    %5 = vector.broadcast %4 : vector<1x128xf32> to vector<128x128xf32>
    %6 = arith.addf %3, %5 : vector<128x128xf32>
    %cst = arith.constant 1.000000e-01 : f32
    %7 = vector.broadcast %cst : f32 to vector<128x128xf32>
    %8 = arith.mulf %7, %6 : vector<128x128xf32>
    %9 = arith.maximumf %6, %8 : vector<128x128xf32>
    %10 = arith.truncf %9 : vector<128x128xf32> to vector<128x128xbf16>
    %c0_5 = arith.constant 0 : index
    %c0_6 = arith.constant 0 : index
    %11 = vector.load %arg4[%c0_5, %c0_6] : memref<128x128xbf16, #tpu.memory_space<vmem>>, vector<128x128xbf16>
    %cst_7 = arith.constant dense<0.000000e+00> : vector<128x128xf32>
    %12 = tpu.matmul %10, %11, %cst_7 {dimension_numbers = #tpu.dot_dimension_numbers<[1], [0], [0], [1], [0, 0, 1, 1], [], []>} : vector<128x128xbf16>, vector<128x128xbf16>, vector<128x128xf32> -> vector<128x128xf32>
    %c0_8 = arith.constant 0 : index
    %c0_9 = arith.constant 0 : index
    %13 = vector.load %arg5[%c0_8, %c0_9] : memref<1x128xf32, #tpu.memory_space<vmem>>, vector<1x128xf32>
    %14 = vector.broadcast %13 : vector<1x128xf32> to vector<128x128xf32>
    %15 = arith.addf %12, %14 : vector<128x128xf32>
    %c0_10 = arith.constant 0 : index
    %c0_11 = arith.constant 0 : index
    %16 = vector.load %arg6[%c0_10, %c0_11] : memref<128x128xf32, #tpu.memory_space<vmem>>, vector<128x128xf32>
    tpu.vector_store %arg6[%c0_10, %c0_11], %15 {strides = array<i32>} : memref<128x128xf32, #tpu.memory_space<vmem>>, vector<128x128xf32>,
    return
  }
  func.func @transform_0(%arg0: i32) -> (i32, i32) {
    %c0_i32 = arith.constant 0 : i32
    %c0_i32_0 = arith.constant 0 : i32
    return %arg0, %c0_i32 : i32, i32
  }
  func.func @transform_1(%arg0: i32) -> (i32, i32) {
    %c0_i32 = arith.constant 0 : i32
    %c0_i32_0 = arith.constant 0 : i32
    %c0_i32_1 = arith.constant 0 : i32
    return %c0_i32, %c0_i32_0 : i32, i32
  }
  func.func @transform_2(%arg0: i32) -> (i32, i32) {
    %c0_i32 = arith.constant 0 : i32
    %c0_i32_0 = arith.constant 0 : i32
    %c0_i32_1 = arith.constant 0 : i32
    return %c0_i32, %c0_i32_0 : i32, i32
  }
  func.func @transform_3(%arg0: i32) -> (i32, i32) {
    %c0_i32 = arith.constant 0 : i32
    %c0_i32_0 = arith.constant 0 : i32
    %c0_i32_1 = arith.constant 0 : i32
    return %c0_i32, %c0_i32_0 : i32, i32
  }
  func.func @transform_4(%arg0: i32) -> (i32, i32) {
    %c0_i32 = arith.constant 0 : i32
    %c0_i32_0 = arith.constant 0 : i32
    %c0_i32_1 = arith.constant 0 : i32
    return %c0_i32, %c0_i32_0 : i32, i32
  }
  func.func @transform_5(%arg0: i32) -> (i32, i32) {
    %c0_i32 = arith.constant 0 : i32
    %c0_i32_0 = arith.constant 0 : i32
    return %arg0, %c0_i32 : i32, i32
  }
}

</mosaic_0001>

<llo_original>
// kernel: qnet_categorical_forward.3
$region0: #{qnet_categorical_forward.3}
  #allocation0 [shape = 'u32[]', space=smem, size = 0x4, offset = 0x4, fixed_abs, tag = 'smem constant byte address 0x4 - core index']
  #allocation1 [shape = 'u32[72,128]{1,0:T(1,128)}', space=vmem, size = 0x9000, scoped, tag = 'internal scratch']
  %s0 = inlined_call_operand.vmem [shape: f32[256,128], index: 0, kind: input, shape index: {}]
  %s1 = inlined_call_operand.vmem [shape: f32[1,128], index: 1, kind: input, shape index: {}]
  %s2 = inlined_call_operand.vmem [shape: f32[1,128], index: 2, kind: input, shape index: {}]
  %s3 = inlined_call_operand.vmem [shape: bf16[128,128], index: 3, kind: input, shape index: {}]
  %s4 = inlined_call_operand.vmem [shape: f32[1,128], index: 4, kind: input, shape index: {}]
  %s5 = inlined_call_operand.vmem [shape: f32[256,128], index: 5, kind: output, shape index: {}]
  %s6 = sld [smem:[#allocation0]]
  $region53: #{qnet_categorical_forward.3} parent=0
    _
  %s8 = ssub.s32 1, %s6
  %s9 = scalar_select 0, %s8, %s6
  loop: start=0, step=1, limit=4
  $region2: #{qnet_categorical_forward.3} parent=0 // loop_pre_header
    _
  $region3: #{qnet_categorical_forward.3} parent=0 // loop_header
    %s11 = sphi 0, %s15
    %p12 = scmp.ge.s32.totalorder %s11, 4
    %s21 = sphi 0, %s23
    %s24 = sphi 0, %s21
    %s25 = sphi 0, %s24
    %s41 = sphi 0, %s25
    %s45 = sphi 0, %s45
    %s47 = sphi 0, %s45
    %s48 = sphi 0, %s47
    %s62 = sphi 0, %s48
    %s66 = sphi 0, %s66
    %s68 = sphi 0, %s66
    %s69 = sphi 0, %s68
    %s83 = sphi 0, %s69
    %s87 = sphi 0, %s87
    %s89 = sphi 0, %s87
    %s90 = sphi 0, %s89
    %s104 = sphi 0, %s90
    %s108 = sphi 0, %s108
    %s110 = sphi 0, %s108
    %s111 = sphi 0, %s110
    %s125 = sphi 0, %s111
    %s131 = sphi 0, %s133
    %s134 = sphi 0, %s131
    %s135 = sphi 0, %s134
    %s151 = sphi 0, %s135
  $region4: #{qnet_categorical_forward.3} parent=0 // loop_header_branch
    %14 = sbr.rel (%p12) target = $region8
  $region5: #{qnet_categorical_forward.3} parent=0 // loop_body
    %s16 = ssub.s32 %s11, 1
    %s17 = ssub.s32 %s11, 2
    %s18 = sadd.s32 %s11, 1
    %s19 = ssub.s32 %s11, %s18
    %p20 = scmp.eq.s32.totalorder %s19, 0
    %s22 = sadd.s32 %s21, 1
    %s23 = scalar_select %p20, %s21, %s22
    %p26 = pneg %p20
    %p27 = scmp.eq.s32.totalorder %s11, 1
    %p28 = por %p26, %p27
    %p29 = scmp.ne.s32.totalorder %s21, %s24
    %p30 = scmp.eq.s32.totalorder %s11, 0
    %p31 = por %p29, %p30
    %p32 = scmp.ne.s32.totalorder %s21, %s24
    %p33 = scmp.eq.s32.totalorder %s16, 1
    %p34 = por %p32, %p33
    %p35 = scmp.ne.s32.totalorder %s24, %s25
    %p36 = scmp.eq.s32.totalorder %s16, 0
    %p37 = por %p35, %p36
    %p38 = scmp.ne.s32.totalorder %s24, %s25
    %p39 = scmp.eq.s32.totalorder %s17, 1
    %p40 = por %p38, %p39
    %p42 = scmp.ne.s32.totalorder %s25, %s41
    %p43 = scmp.eq.s32.totalorder %s17, 0
    %p44 = por %p42, %p43
    %s46 = sadd.s32 %s45, 1
    %p49 = scmp.eq.s32.totalorder %s11, 1
    %p50 = scmp.ne.s32.totalorder %s45, %s47
    %p51 = scmp.eq.s32.totalorder %s11, 0
    %p52 = por %p50, %p51
    %p53 = scmp.ne.s32.totalorder %s45, %s47
    %p54 = scmp.eq.s32.totalorder %s16, 1
    %p55 = por %p53, %p54
    %p56 = scmp.ne.s32.totalorder %s47, %s48
    %p57 = scmp.eq.s32.totalorder %s16, 0
    %p58 = por %p56, %p57
    %p59 = scmp.ne.s32.totalorder %s47, %s48
    %p60 = scmp.eq.s32.totalorder %s17, 1
    %p61 = por %p59, %p60
    %p63 = scmp.ne.s32.totalorder %s48, %s62
    %p64 = scmp.eq.s32.totalorder %s17, 0
    %p65 = por %p63, %p64
    %s67 = sadd.s32 %s66, 1
    %p70 = scmp.eq.s32.totalorder %s11, 1
    %p71 = scmp.ne.s32.totalorder %s66, %s68
    %p72 = scmp.eq.s32.totalorder %s11, 0
    %p73 = por %p71, %p72
    %p74 = scmp.ne.s32.totalorder %s66, %s68
    %p75 = scmp.eq.s32.totalorder %s16, 1
    %p76 = por %p74, %p75
    %p77 = scmp.ne.s32.totalorder %s68, %s69
    %p78 = scmp.eq.s32.totalorder %s16, 0
    %p79 = por %p77, %p78
    %p80 = scmp.ne.s32.totalorder %s68, %s69
    %p81 = scmp.eq.s32.totalorder %s17, 1
    %p82 = por %p80, %p81
    %p84 = scmp.ne.s32.totalorder %s69, %s83
    %p85 = scmp.eq.s32.totalorder %s17, 0
    %p86 = por %p84, %p85
    %s88 = sadd.s32 %s87, 1
    %p91 = scmp.eq.s32.totalorder %s11, 1
    %p92 = scmp.ne.s32.totalorder %s87, %s89
    %p93 = scmp.eq.s32.totalorder %s11, 0
    %p94 = por %p92, %p93
    %p95 = scmp.ne.s32.totalorder %s87, %s89
    %p96 = scmp.eq.s32.totalorder %s16, 1
    %p97 = por %p95, %p96
    %p98 = scmp.ne.s32.totalorder %s89, %s90
    %p99 = scmp.eq.s32.totalorder %s16, 0
    %p100 = por %p98, %p99
    %p101 = scmp.ne.s32.totalorder %s89, %s90
    %p102 = scmp.eq.s32.totalorder %s17, 1
    %p103 = por %p101, %p102
    %p105 = scmp.ne.s32.totalorder %s90, %s104
    %p106 = scmp.eq.s32.totalorder %s17, 0
    %p107 = por %p105, %p106
    %s109 = sadd.s32 %s108, 1
    %p112 = scmp.eq.s32.totalorder %s11, 1
    %p113 = scmp.ne.s32.totalorder %s108, %s110
    %p114 = scmp.eq.s32.totalorder %s11, 0
    %p115 = por %p113, %p114
    %p116 = scmp.ne.s32.totalorder %s108, %s110
    %p117 = scmp.eq.s32.totalorder %s16, 1
    %p118 = por %p116, %p117
    %p119 = scmp.ne.s32.totalorder %s110, %s111
    %p120 = scmp.eq.s32.totalorder %s16, 0
    %p121 = por %p119, %p120
    %p122 = scmp.ne.s32.totalorder %s110, %s111
    %p123 = scmp.eq.s32.totalorder %s17, 1
    %p124 = por %p122, %p123
    %p126 = scmp.ne.s32.totalorder %s111, %s125
    %p127 = scmp.eq.s32.totalorder %s17, 0
    %p128 = por %p126, %p127
    %s129 = ssub.s32 %s11, %s18
    %p130 = scmp.eq.s32.totalorder %s129, 0
    %s132 = sadd.s32 %s131, 1
    %s133 = scalar_select %p130, %s131, %s132
    %p136 = pneg %p130
    %p137 = scmp.eq.s32.totalorder %s11, 1
    %p138 = por %p136, %p137
    %p139 = scmp.ne.s32.totalorder %s131, %s134
    %p140 = scmp.eq.s32.totalorder %s11, 0
    %p141 = por %p139, %p140
    %p142 = scmp.ne.s32.totalorder %s131, %s134
    %p143 = scmp.eq.s32.totalorder %s16, 1
    %p144 = por %p142, %p143
    %p145 = scmp.ne.s32.totalorder %s134, %s135
    %p146 = scmp.eq.s32.totalorder %s16, 0
    %p147 = por %p145, %p146
    %p148 = scmp.ne.s32.totalorder %s134, %s135
    %p149 = scmp.eq.s32.totalorder %s17, 1
    %p150 = por %p148, %p149
    %p152 = scmp.ne.s32.totalorder %s135, %s151
    %p153 = scmp.eq.s32.totalorder %s17, 0
    %p154 = por %p152, %p153
    %p155 = scmp.le.s32.totalorder 1, %s11
    %p156 = scmp.lt.s32.totalorder %s11, 3
    %p157 = pnand %p155, %p156
    %p158 = pneg %p157
    // Predicated region
    $region9: #{qnet_categorical_forward.3} parent=5 // pred_check
      _
    $region10: #{qnet_categorical_forward.3} parent=5 // pred_check_branch
      %160 = sbr.rel (%p157) target = $region12
    $region11: #{qnet_categorical_forward.3} parent=5 // pred_region
      %s161 = ssub.s32 %s11, 1
      // Predicated region
      $region13: #{qnet_categorical_forward.3} parent=11 // pred_check
        %p162 = pneg %p58
      $region14: #{qnet_categorical_forward.3} parent=11 // pred_check_branch
        %164 = sbr.rel (%p162) target = $region16
      $region15: #{qnet_categorical_forward.3} parent=11 // pred_region
        _
      $region16: #{qnet_categorical_forward.3} parent=11 // pred_fallthru
        _
      // Predicated region
      $region17: #{qnet_categorical_forward.3} parent=11 // pred_check
        %p165 = pneg %p79
      $region18: #{qnet_categorical_forward.3} parent=11 // pred_check_branch
        %167 = sbr.rel (%p165) target = $region20
      $region19: #{qnet_categorical_forward.3} parent=11 // pred_region
        _
      $region20: #{qnet_categorical_forward.3} parent=11 // pred_fallthru
        _
      // Predicated region
      $region21: #{qnet_categorical_forward.3} parent=11 // pred_check
        %p168 = pneg %p100
      $region22: #{qnet_categorical_forward.3} parent=11 // pred_check_branch
        %170 = sbr.rel (%p168) target = $region24
      $region23: #{qnet_categorical_forward.3} parent=11 // pred_region
        _
      $region24: #{qnet_categorical_forward.3} parent=11 // pred_fallthru
        _
      // Predicated region
      $region25: #{qnet_categorical_forward.3} parent=11 // pred_check
        %p171 = pneg %p121
      $region26: #{qnet_categorical_forward.3} parent=11 // pred_check_branch
        %173 = sbr.rel (%p171) target = $region28
      $region27: #{qnet_categorical_forward.3} parent=11 // pred_region
        _
      $region28: #{qnet_categorical_forward.3} parent=11 // pred_fallthru
        _
    $region12: #{qnet_categorical_forward.3} parent=5 // pred_fallthru
      _
    %p174 = scmp.lt.s32.totalorder %s11, 2
    // Predicated region
    $region29: #{qnet_categorical_forward.3} parent=5 // pred_check
      %p175 = pneg %p174
    $region30: #{qnet_categorical_forward.3} parent=5 // pred_check_branch
      %177 = sbr.rel (%p175) target = $region32
    $region31: #{qnet_categorical_forward.3} parent=5 // pred_region
      // Predicated region
      $region33: #{qnet_categorical_forward.3} parent=31 // pred_check
        %p178 = pneg %p31
      $region34: #{qnet_categorical_forward.3} parent=31 // pred_check_branch
        %180 = sbr.rel (%p178) target = $region36
      $region35: #{qnet_categorical_forward.3} parent=31 // pred_region
        %s181 = smul.u32 16, %s11
        %p182 = scmp.lt.s32.totalorder %s181, 31
        %s183 = scalar_select %p182, %s181, 31
        %s184 = smul.addr %s183, 8
        %s185 = scalar_lea.vmem %s0, %s184
        %s186 = smul.u32 16, %s11
      $region36: #{qnet_categorical_forward.3} parent=31 // pred_fallthru
        _
    $region32: #{qnet_categorical_forward.3} parent=5 // pred_fallthru
      _
    %p187 = scmp.le.s32.totalorder 1, %s11
    %p188 = scmp.lt.s32.totalorder %s11, 3
    %p189 = pnand %p187, %p188
    %p190 = pneg %p189
    // Predicated region
    $region37: #{qnet_categorical_forward.3} parent=5 // pred_check
      _
    $region38: #{qnet_categorical_forward.3} parent=5 // pred_check_branch
      %192 = sbr.rel (%p189) target = $region40
    $region39: #{qnet_categorical_forward.3} parent=5 // pred_region
      %s193 = ssub.s32 %s11, 1
      %s194 = smul.u32 16, %s16
      %p195 = scmp.lt.s32.totalorder %s194, 31
      %s196 = scalar_select %p195, %s194, 31
      %s197 = smul.addr %s196, 8
      %s198 = scalar_lea.vmem %s0, %s197
      %p199 = pneg %p37
      %p200 = pneg %p34
      %p201 = pneg %p58
      %p202 = pneg %p55
      %p203 = pneg %p79
      %p204 = pneg %p76
      %p205 = pneg %p100
      %p206 = pneg %p97
      %p207 = pneg %p121
      %p208 = pneg %p118
      %p209 = pneg %p147
      %p210 = pneg %p144
      %s211 = smul.u32 16, %s16
      %p212 = scmp.lt.s32.totalorder %s211, 31
      %s213 = scalar_select %p212, %s211, 31
      %s214 = smul.addr %s213, 8
      %s215 = scalar_lea.vmem %s5, %s214
      %s216 = smul.u32 16, %s16
      %p217 = scmp.lt.s32.totalorder %s216, 31
      %s218 = scalar_select %p217, %s216, 31
      %s219 = smul.addr %s218, 8
      %s220 = scalar_lea.vmem %s0, %s219
      %s221 = smul.u32 16, %s16
      %s222 = smul.u32 16, %s16
      %p223 = scmp.lt.s32.totalorder %s222, 31
      %s224 = scalar_select %p223, %s222, 31
      %s225 = smul.addr %s224, 8
      %s226 = scalar_lea.vmem %s5, %s225
      %s227 = smul.u32 16, %s16
      %v228 = vld [vmem:[%s220] sm:$0xff]
      %v229 = vld [vmem:[%s220 + $0x8] sm:$0xff]
      %v230 = vld [vmem:[%s220 + $0x10] sm:$0xff]
      %v231 = vld [vmem:[%s220 + $0x18] sm:$0xff]
      %v232 = vld [vmem:[%s220 + $0x20] sm:$0xff]
      %v233 = vld [vmem:[%s220 + $0x28] sm:$0xff]
      %v234 = vld [vmem:[%s220 + $0x30] sm:$0xff]
      %v235 = vld [vmem:[%s220 + $0x38] sm:$0xff]
      %v236 = vld [vmem:[%s220 + $0x40] sm:$0xff]
      %v237 = vld [vmem:[%s220 + $0x48] sm:$0xff]
      %v238 = vld [vmem:[%s220 + $0x50] sm:$0xff]
      %v239 = vld [vmem:[%s220 + $0x58] sm:$0xff]
      %v240 = vld [vmem:[%s220 + $0x60] sm:$0xff]
      %v241 = vld [vmem:[%s220 + $0x68] sm:$0xff]
      %v242 = vld [vmem:[%s220 + $0x70] sm:$0xff]
      %v243 = vld [vmem:[%s220 + $0x78] sm:$0xff]
      %v244 = vld [vmem:[%s1] sm:$0x1]
      %v246 = vperm.slane %v244, 0
      %v248 = vmul.f32 %v228, %v246
      %v249 = vmul.f32 %v229, %v246
      %v250 = vmul.f32 %v230, %v246
      %v251 = vmul.f32 %v231, %v246
      %v252 = vmul.f32 %v232, %v246
      %v253 = vmul.f32 %v233, %v246
      %v254 = vmul.f32 %v234, %v246
      %v255 = vmul.f32 %v235, %v246
      %v256 = vmul.f32 %v236, %v246
      %v257 = vmul.f32 %v237, %v246
      %v258 = vmul.f32 %v238, %v246
      %v259 = vmul.f32 %v239, %v246
      %v260 = vmul.f32 %v240, %v246
      %v261 = vmul.f32 %v241, %v246
      %v262 = vmul.f32 %v242, %v246
      %v263 = vmul.f32 %v243, %v246
      %v264 = vld [vmem:[%s2] sm:$0x1]
      %v266 = vperm.slane %v264, 0
      %v268 = vadd.f32 %v248, %v266
      %v269 = vadd.f32 %v249, %v266
      %v270 = vadd.f32 %v250, %v266
      %v271 = vadd.f32 %v251, %v266
      %v272 = vadd.f32 %v252, %v266
      %v273 = vadd.f32 %v253, %v266
      %v274 = vadd.f32 %v254, %v266
      %v275 = vadd.f32 %v255, %v266
      %v276 = vadd.f32 %v256, %v266
      %v277 = vadd.f32 %v257, %v266
      %v278 = vadd.f32 %v258, %v266
      %v279 = vadd.f32 %v259, %v266
      %v280 = vadd.f32 %v260, %v266
      %v281 = vadd.f32 %v261, %v266
      %v282 = vadd.f32 %v262, %v266
      %v283 = vadd.f32 %v263, %v266
      %v284 = vmul.f32 %v268, 0.1
      %v285 = vmul.f32 %v269, 0.1
      %v286 = vmul.f32 %v270, 0.1
      %v287 = vmul.f32 %v271, 0.1
      %v288 = vmul.f32 %v272, 0.1
      %v289 = vmul.f32 %v273, 0.1
      %v290 = vmul.f32 %v274, 0.1
      %v291 = vmul.f32 %v275, 0.1
      %v292 = vmul.f32 %v276, 0.1
      %v293 = vmul.f32 %v277, 0.1
      %v294 = vmul.f32 %v278, 0.1
      %v295 = vmul.f32 %v279, 0.1
      %v296 = vmul.f32 %v280, 0.1
      %v297 = vmul.f32 %v281, 0.1
      %v298 = vmul.f32 %v282, 0.1
      %v299 = vmul.f32 %v283, 0.1
      %v300 = vmax.f32 %v268, %v284
      %v301 = vmax.f32 %v269, %v285
      %v302 = vmax.f32 %v270, %v286
      %v303 = vmax.f32 %v271, %v287
      %v304 = vmax.f32 %v272, %v288
      %v305 = vmax.f32 %v273, %v289
      %v306 = vmax.f32 %v274, %v290
      %v307 = vmax.f32 %v275, %v291
      %v308 = vmax.f32 %v276, %v292
      %v309 = vmax.f32 %v277, %v293
      %v310 = vmax.f32 %v278, %v294
      %v311 = vmax.f32 %v279, %v295
      %v312 = vmax.f32 %v280, %v296
      %v313 = vmax.f32 %v281, %v297
      %v314 = vmax.f32 %v282, %v298
      %v315 = vmax.f32 %v283, %v299
      %v316 = vpack.c.bf16 %v301, %v300
      %v317 = vpack.c.bf16 %v303, %v302
      %v318 = vpack.c.bf16 %v305, %v304
      %v319 = vpack.c.bf16 %v307, %v306
      %v320 = vpack.c.bf16 %v309, %v308
      %v321 = vpack.c.bf16 %v311, %v310
      %v322 = vpack.c.bf16 %v313, %v312
      %v323 = vpack.c.bf16 %v315, %v314
      %v324 = vld [vmem:[%s3] sm:$0xf]
      %v325 = vld [vmem:[%s3 + $0x4] sm:$0xf]
      %v326 = vld [vmem:[%s3 + $0x8] sm:$0xf]
      %v327 = vld [vmem:[%s3 + $0xc] sm:$0xf]
      %v328 = vld [vmem:[%s3 + $0x10] sm:$0xf]
      %v329 = vld [vmem:[%s3 + $0x14] sm:$0xf]
      %v330 = vld [vmem:[%s3 + $0x18] sm:$0xf]
      %v331 = vld [vmem:[%s3 + $0x1c] sm:$0xf]
      %v332 = vld [vmem:[%s3 + $0x20] sm:$0xf]
      %v333 = vld [vmem:[%s3 + $0x24] sm:$0xf]
      %v334 = vld [vmem:[%s3 + $0x28] sm:$0xf]
      %v335 = vld [vmem:[%s3 + $0x2c] sm:$0xf]
      %v336 = vld [vmem:[%s3 + $0x30] sm:$0xf]
      %v337 = vld [vmem:[%s3 + $0x34] sm:$0xf]
      %v338 = vld [vmem:[%s3 + $0x38] sm:$0xf]
      %v339 = vld [vmem:[%s3 + $0x3c] sm:$0xf]
      %v340 = vld [vmem:[%s4] sm:$0x1]
      %v342 = vperm.slane %v340, 0
      %v360 = vunpack.c.l.b16 %v324
      %v361 = vunpack.c.l.b16 %v325
      %v362 = vunpack.c.l.b16 %v326
      %v363 = vunpack.c.l.b16 %v327
      %v364 = vunpack.c.l.b16 %v328
      %v365 = vunpack.c.l.b16 %v329
      %v366 = vunpack.c.l.b16 %v330
      %v367 = vunpack.c.l.b16 %v331
      %v368 = vunpack.c.l.b16 %v332
      %v369 = vunpack.c.l.b16 %v333
      %v370 = vunpack.c.l.b16 %v334
      %v371 = vunpack.c.l.b16 %v335
      %v372 = vunpack.c.l.b16 %v336
      %v373 = vunpack.c.l.b16 %v337
      %v374 = vunpack.c.l.b16 %v338
      %v375 = vunpack.c.l.b16 %v339
      %v376 = vpack.c.b16 %v361, %v360
      %v377 = vpack.c.b16 %v363, %v362
      %v378 = vpack.c.b16 %v365, %v364
      %v379 = vpack.c.b16 %v367, %v366
      %v380 = vpack.c.b16 %v369, %v368
      %v381 = vpack.c.b16 %v371, %v370
      %v382 = vpack.c.b16 %v373, %v372
      %v383 = vpack.c.b16 %v375, %v374
      %392 = vmatpush.bf16.msra.mxu0 %v383
      %393 = vmatpush.bf16.msra.mxu0 %v382
      %394 = vmatpush.bf16.msra.mxu0 %v381
      %395 = vmatpush.bf16.msra.mxu0 %v380
      %396 = vmatpush.bf16.msra.mxu0 %v379
      %397 = vmatpush.bf16.msra.mxu0 %v378
      %398 = vmatpush.bf16.msra.mxu0 %v377
      %399 = vmatpush.bf16.msra.mxu0 %v376
      %400 = vmatmul.bf16.gmra.mxu0 %v316
      %v401 = vpop.f32.mrf.mxu0
      %v402 = vadd.f32 %v342, %v401
      %v403 = vpop.f32.mrf.mxu0
      %v404 = vadd.f32 %v342, %v403
      %405 = vmatmul.bf16.gmra.mxu0 %v317
      %v406 = vpop.f32.mrf.mxu0
      %v407 = vadd.f32 %v342, %v406
      %v408 = vpop.f32.mrf.mxu0
      %v409 = vadd.f32 %v342, %v408
      %410 = vmatmul.bf16.gmra.mxu0 %v318
      %v411 = vpop.f32.mrf.mxu0
      %v412 = vadd.f32 %v342, %v411
      %v413 = vpop.f32.mrf.mxu0
      %v414 = vadd.f32 %v342, %v413
      %415 = vmatmul.bf16.gmra.mxu0 %v319
      %v416 = vpop.f32.mrf.mxu0
      %v417 = vadd.f32 %v342, %v416
      %v418 = vpop.f32.mrf.mxu0
      %v419 = vadd.f32 %v342, %v418
      %420 = vmatmul.bf16.gmra.mxu0 %v320
      %v421 = vpop.f32.mrf.mxu0
      %v422 = vadd.f32 %v342, %v421
      %v423 = vpop.f32.mrf.mxu0
      %v424 = vadd.f32 %v342, %v423
      %425 = vmatmul.bf16.gmra.mxu0 %v321
      %v426 = vpop.f32.mrf.mxu0
      %v427 = vadd.f32 %v342, %v426
      %v428 = vpop.f32.mrf.mxu0
      %v429 = vadd.f32 %v342, %v428
      %430 = vmatmul.bf16.gmra.mxu0 %v322
      %v431 = vpop.f32.mrf.mxu0
      %v432 = vadd.f32 %v342, %v431
      %v433 = vpop.f32.mrf.mxu0
      %v434 = vadd.f32 %v342, %v433
      %435 = vmatmul.bf16.gmra.mxu0 %v323
      %v436 = vpop.f32.mrf.mxu0
      %v437 = vadd.f32 %v342, %v436
      %v438 = vpop.f32.mrf.mxu0
      %v439 = vadd.f32 %v342, %v438
      %440 = vdwg.mxu0
      %441 = vst [vmem:[%s226] sm:$0xff] %v402
      %442 = vst [vmem:[%s226 + $0x8] sm:$0xff] %v404
      %443 = vst [vmem:[%s226 + $0x10] sm:$0xff] %v407
      %444 = vst [vmem:[%s226 + $0x18] sm:$0xff] %v409
      %445 = vst [vmem:[%s226 + $0x20] sm:$0xff] %v412
      %446 = vst [vmem:[%s226 + $0x28] sm:$0xff] %v414
      %447 = vst [vmem:[%s226 + $0x30] sm:$0xff] %v417
      %448 = vst [vmem:[%s226 + $0x38] sm:$0xff] %v419
      %449 = vst [vmem:[%s226 + $0x40] sm:$0xff] %v422
      %450 = vst [vmem:[%s226 + $0x48] sm:$0xff] %v424
      %451 = vst [vmem:[%s226 + $0x50] sm:$0xff] %v427
      %452 = vst [vmem:[%s226 + $0x58] sm:$0xff] %v429
      %453 = vst [vmem:[%s226 + $0x60] sm:$0xff] %v432
      %454 = vst [vmem:[%s226 + $0x68] sm:$0xff] %v434
      %455 = vst [vmem:[%s226 + $0x70] sm:$0xff] %v437
      %456 = vst [vmem:[%s226 + $0x78] sm:$0xff] %v439
      %s457 = smul.u32 16, %s16
      %p458 = scmp.lt.s32.totalorder %s457, 31
      %s459 = scalar_select %p458, %s457, 31
      %s460 = smul.addr %s459, 8
      %s461 = scalar_lea.vmem %s5, %s460
      // Predicated region
      $region41: #{qnet_categorical_forward.3} parent=39 // pred_check
        %p462 = pneg %p144
      $region42: #{qnet_categorical_forward.3} parent=39 // pred_check_branch
        %464 = sbr.rel (%p462) target = $region44
      $region43: #{qnet_categorical_forward.3} parent=39 // pred_region
        %s465 = smul.u32 16, %s16
      $region44: #{qnet_categorical_forward.3} parent=39 // pred_fallthru
        _
    $region40: #{qnet_categorical_forward.3} parent=5 // pred_fallthru
      _
    %p466 = scmp.le.s32.totalorder 2, %s11
    // Predicated region
    $region45: #{qnet_categorical_forward.3} parent=5 // pred_check
      %p467 = pneg %p466
    $region46: #{qnet_categorical_forward.3} parent=5 // pred_check_branch
      %469 = sbr.rel (%p467) target = $region48
    $region47: #{qnet_categorical_forward.3} parent=5 // pred_region
      %s470 = ssub.s32 %s11, 2
      // Predicated region
      $region49: #{qnet_categorical_forward.3} parent=47 // pred_check
        %p471 = pneg %p150
      $region50: #{qnet_categorical_forward.3} parent=47 // pred_check_branch
        %473 = sbr.rel (%p471) target = $region52
      $region51: #{qnet_categorical_forward.3} parent=47 // pred_region
        %s474 = smul.u32 16, %s17
        %p475 = scmp.lt.s32.totalorder %s474, 31
        %s476 = scalar_select %p475, %s474, 31
        %s477 = smul.addr %s476, 8
        %s478 = scalar_lea.vmem %s5, %s477
      $region52: #{qnet_categorical_forward.3} parent=47 // pred_fallthru
        _
    $region48: #{qnet_categorical_forward.3} parent=5 // pred_fallthru
      _
  $region6: #{qnet_categorical_forward.3} parent=0 // loop_footer
    %s15 = sadd.s32 1, %s11
  $region7: #{qnet_categorical_forward.3} parent=0 // loop_footer_branch
    %10 = sbr.rel target = $region3
  $region8: #{qnet_categorical_forward.3} parent=0 // loop_exit
    _

// kernel: qnet_categorical_forward.2
$region0: #{qnet_categorical_forward.2}
  #allocation0 [shape = 'u32[]', space=smem, size = 0x4, offset = 0x4, fixed_abs, tag = 'smem constant byte address 0x4 - core index']
  #allocation1 [shape = 'u32[72,128]{1,0:T(1,128)}', space=vmem, size = 0x9000, scoped, tag = 'internal scratch']
  %s0 = inlined_call_operand.vmem [shape: f32[256,1024], index: 0, kind: input, shape index: {}]
  %s1 = inlined_call_operand.vmem [shape: bf16[1024,128], index: 1, kind: input, shape index: {}]
  %s2 = inlined_call_operand.vmem [shape: f32[256,128], index: 2, kind: output, shape index: {0}]
  %s3 = inlined_call_operand.vmem [shape: f32[2,2,128], index: 3, kind: output, shape index: {1}]
  %4 = xla_tuple %s2, %s3
  %s5 = sld [smem:[#allocation0]]
  $region49: #{qnet_categorical_forward.2} parent=0
    _
  %s7 = ssub.s32 1, %s5
  %s8 = scalar_select 0, %s7, %s5
  loop: start=0, step=1, limit=4
  $region2: #{qnet_categorical_forward.2} parent=0 // loop_pre_header
    _
  $region3: #{qnet_categorical_forward.2} parent=0 // loop_header
    %s10 = sphi 0, %s14
    %p11 = scmp.ge.s32.totalorder %s10, 4
    %s20 = sphi 0, %s22
    %s23 = sphi 0, %s20
    %s24 = sphi 0, %s23
    %s40 = sphi 0, %s24
    %s44 = sphi 0, %s44
    %s46 = sphi 0, %s44
    %s47 = sphi 0, %s46
    %s61 = sphi 0, %s47
    %s67 = sphi 0, %s69
    %s70 = sphi 0, %s67
    %s71 = sphi 0, %s70
    %s87 = sphi 0, %s71
    %s93 = sphi 0, %s95
    %s96 = sphi 0, %s93
    %s97 = sphi 0, %s96
    %s113 = sphi 0, %s97
  $region4: #{qnet_categorical_forward.2} parent=0 // loop_header_branch
    %13 = sbr.rel (%p11) target = $region8
  $region5: #{qnet_categorical_forward.2} parent=0 // loop_body
    %s15 = ssub.s32 %s10, 1
    %s16 = ssub.s32 %s10, 2
    %s17 = sadd.s32 %s10, 1
    %s18 = ssub.s32 %s10, %s17
    %p19 = scmp.eq.s32.totalorder %s18, 0
    %s21 = sadd.s32 %s20, 1
    %s22 = scalar_select %p19, %s20, %s21
    %p25 = pneg %p19
    %p26 = scmp.eq.s32.totalorder %s10, 1
    %p27 = por %p25, %p26
    %p28 = scmp.ne.s32.totalorder %s20, %s23
    %p29 = scmp.eq.s32.totalorder %s10, 0
    %p30 = por %p28, %p29
    %p31 = scmp.ne.s32.totalorder %s20, %s23
    %p32 = scmp.eq.s32.totalorder %s15, 1
    %p33 = por %p31, %p32
    %p34 = scmp.ne.s32.totalorder %s23, %s24
    %p35 = scmp.eq.s32.totalorder %s15, 0
    %p36 = por %p34, %p35
    %p37 = scmp.ne.s32.totalorder %s23, %s24
    %p38 = scmp.eq.s32.totalorder %s16, 1
    %p39 = por %p37, %p38
    %p41 = scmp.ne.s32.totalorder %s24, %s40
    %p42 = scmp.eq.s32.totalorder %s16, 0
    %p43 = por %p41, %p42
    %s45 = sadd.s32 %s44, 1
    %p48 = scmp.eq.s32.totalorder %s10, 1
    %p49 = scmp.ne.s32.totalorder %s44, %s46
    %p50 = scmp.eq.s32.totalorder %s10, 0
    %p51 = por %p49, %p50
    %p52 = scmp.ne.s32.totalorder %s44, %s46
    %p53 = scmp.eq.s32.totalorder %s15, 1
    %p54 = por %p52, %p53
    %p55 = scmp.ne.s32.totalorder %s46, %s47
    %p56 = scmp.eq.s32.totalorder %s15, 0
    %p57 = por %p55, %p56
    %p58 = scmp.ne.s32.totalorder %s46, %s47
    %p59 = scmp.eq.s32.totalorder %s16, 1
    %p60 = por %p58, %p59
    %p62 = scmp.ne.s32.totalorder %s47, %s61
    %p63 = scmp.eq.s32.totalorder %s16, 0
    %p64 = por %p62, %p63
    %s65 = ssub.s32 %s10, %s17
    %p66 = scmp.eq.s32.totalorder %s65, 0
    %s68 = sadd.s32 %s67, 1
    %s69 = scalar_select %p66, %s67, %s68
    %p72 = pneg %p66
    %p73 = scmp.eq.s32.totalorder %s10, 1
    %p74 = por %p72, %p73
    %p75 = scmp.ne.s32.totalorder %s67, %s70
    %p76 = scmp.eq.s32.totalorder %s10, 0
    %p77 = por %p75, %p76
    %p78 = scmp.ne.s32.totalorder %s67, %s70
    %p79 = scmp.eq.s32.totalorder %s15, 1
    %p80 = por %p78, %p79
    %p81 = scmp.ne.s32.totalorder %s70, %s71
    %p82 = scmp.eq.s32.totalorder %s15, 0
    %p83 = por %p81, %p82
    %p84 = scmp.ne.s32.totalorder %s70, %s71
    %p85 = scmp.eq.s32.totalorder %s16, 1
    %p86 = por %p84, %p85
    %p88 = scmp.ne.s32.totalorder %s71, %s87
    %p89 = scmp.eq.s32.totalorder %s16, 0
    %p90 = por %p88, %p89
    %s91 = ssub.s32 %s10, %s17
    %p92 = scmp.eq.s32.totalorder %s91, 0
    %s94 = sadd.s32 %s93, 1
    %s95 = scalar_select %p92, %s93, %s94
    %p98 = pneg %p92
    %p99 = scmp.eq.s32.totalorder %s10, 1
    %p100 = por %p98, %p99
    %p101 = scmp.ne.s32.totalorder %s93, %s96
    %p102 = scmp.eq.s32.totalorder %s10, 0
    %p103 = por %p101, %p102
    %p104 = scmp.ne.s32.totalorder %s93, %s96
    %p105 = scmp.eq.s32.totalorder %s15, 1
    %p106 = por %p104, %p105
    %p107 = scmp.ne.s32.totalorder %s96, %s97
    %p108 = scmp.eq.s32.totalorder %s15, 0
    %p109 = por %p107, %p108
    %p110 = scmp.ne.s32.totalorder %s96, %s97
    %p111 = scmp.eq.s32.totalorder %s16, 1
    %p112 = por %p110, %p111
    %p114 = scmp.ne.s32.totalorder %s97, %s113
    %p115 = scmp.eq.s32.totalorder %s16, 0
    %p116 = por %p114, %p115
    %p117 = scmp.le.s32.totalorder 1, %s10
    %p118 = scmp.lt.s32.totalorder %s10, 3
    %p119 = pnand %p117, %p118
    %p120 = pneg %p119
    // Predicated region
    $region9: #{qnet_categorical_forward.2} parent=5 // pred_check
      _
    $region10: #{qnet_categorical_forward.2} parent=5 // pred_check_branch
      %122 = sbr.rel (%p119) target = $region12
    $region11: #{qnet_categorical_forward.2} parent=5 // pred_region
      %s123 = ssub.s32 %s10, 1
      // Predicated region
      $region13: #{qnet_categorical_forward.2} parent=11 // pred_check
        %p124 = pneg %p57
      $region14: #{qnet_categorical_forward.2} parent=11 // pred_check_branch
        %126 = sbr.rel (%p124) target = $region16
      $region15: #{qnet_categorical_forward.2} parent=11 // pred_region
        _
      $region16: #{qnet_categorical_forward.2} parent=11 // pred_fallthru
        _
    $region12: #{qnet_categorical_forward.2} parent=5 // pred_fallthru
      _
    %p127 = scmp.lt.s32.totalorder %s10, 2
    // Predicated region
    $region17: #{qnet_categorical_forward.2} parent=5 // pred_check
      %p128 = pneg %p127
    $region18: #{qnet_categorical_forward.2} parent=5 // pred_check_branch
      %130 = sbr.rel (%p128) target = $region20
    $region19: #{qnet_categorical_forward.2} parent=5 // pred_region
      // Predicated region
      $region21: #{qnet_categorical_forward.2} parent=19 // pred_check
        %p131 = pneg %p30
      $region22: #{qnet_categorical_forward.2} parent=19 // pred_check_branch
        %133 = sbr.rel (%p131) target = $region24
      $region23: #{qnet_categorical_forward.2} parent=19 // pred_region
        %s134 = smul.u32 16, %s10
        %p135 = scmp.lt.s32.totalorder %s134, 31
        %s136 = scalar_select %p135, %s134, 31
        %s137 = smul.addr %s136, 8
        %s138 = smul.addr %s137, 8
        %s139 = scalar_lea.vmem %s0, %s138
        %s140 = smul.u32 16, %s10
      $region24: #{qnet_categorical_forward.2} parent=19 // pred_fallthru
        _
    $region20: #{qnet_categorical_forward.2} parent=5 // pred_fallthru
      _
    %p141 = scmp.le.s32.totalorder 1, %s10
    %p142 = scmp.lt.s32.totalorder %s10, 3
    %p143 = pnand %p141, %p142
    %p144 = pneg %p143
    // Predicated region
    $region25: #{qnet_categorical_forward.2} parent=5 // pred_check
      _
    $region26: #{qnet_categorical_forward.2} parent=5 // pred_check_branch
      %146 = sbr.rel (%p143) target = $region28
    $region27: #{qnet_categorical_forward.2} parent=5 // pred_region
      %s147 = ssub.s32 %s10, 1
      %s148 = smul.u32 16, %s15
      %p149 = scmp.lt.s32.totalorder %s148, 31
      %s150 = scalar_select %p149, %s148, 31
      %s151 = smul.addr %s150, 8
      %s152 = smul.addr %s151, 8
      %s153 = scalar_lea.vmem %s0, %s152
      %p154 = pneg %p36
      %p155 = pneg %p33
      %p156 = pneg %p57
      %p157 = pneg %p54
      %p158 = pneg %p83
      %p159 = pneg %p80
      %s160 = smul.u32 16, %s15
      %p161 = scmp.lt.s32.totalorder %s160, 31
      %s162 = scalar_select %p161, %s160, 31
      %s163 = smul.addr %s162, 8
      %s164 = scalar_lea.vmem %s2, %s163
      %p165 = pneg %p109
      %p166 = pneg %p106
      %p167 = scmp.lt.s32.totalorder %s15, 1
      %s168 = scalar_select %p167, %s15, 1
      %s169 = smul.addr %s168, 2
      %s170 = scalar_lea.vmem %s3, %s169
      %s171 = smul.u32 16, %s15
      %p172 = scmp.lt.s32.totalorder %s171, 31
      %s173 = scalar_select %p172, %s171, 31
      %s174 = smul.addr %s173, 8
      %s175 = smul.addr %s174, 8
      %s176 = scalar_lea.vmem %s0, %s175
      %s177 = smul.u32 16, %s15
      %s178 = smul.u32 16, %s15
      %p179 = scmp.lt.s32.totalorder %s178, 31
      %s180 = scalar_select %p179, %s178, 31
      %s181 = smul.addr %s180, 8
      %s182 = scalar_lea.vmem %s2, %s181
      %s183 = smul.u32 16, %s15
      %p184 = scmp.lt.s32.totalorder %s15, 1
      %s185 = scalar_select %p184, %s15, 1
      %s186 = smul.addr %s185, 2
      %s187 = scalar_lea.vmem %s3, %s186
      %v188 = vld [vmem:[%s176] sm:$0xff]
      %v189 = vld [vmem:[%s176 + $0x8] sm:$0xff]
      %v190 = vld [vmem:[%s176 + $0x10] sm:$0xff]
      %v191 = vld [vmem:[%s176 + $0x18] sm:$0xff]
      %v192 = vld [vmem:[%s176 + $0x20] sm:$0xff]
      %v193 = vld [vmem:[%s176 + $0x28] sm:$0xff]
      %v194 = vld [vmem:[%s176 + $0x30] sm:$0xff]
      %v195 = vld [vmem:[%s176 + $0x38] sm:$0xff]
      %v196 = vld [vmem:[%s176 + $0x40] sm:$0xff]
      %v197 = vld [vmem:[%s176 + $0x48] sm:$0xff]
      %v198 = vld [vmem:[%s176 + $0x50] sm:$0xff]
      %v199 = vld [vmem:[%s176 + $0x58] sm:$0xff]
      %v200 = vld [vmem:[%s176 + $0x60] sm:$0xff]
      %v201 = vld [vmem:[%s176 + $0x68] sm:$0xff]
      %v202 = vld [vmem:[%s176 + $0x70] sm:$0xff]
      %v203 = vld [vmem:[%s176 + $0x78] sm:$0xff]
      %v204 = vld [vmem:[%s176 + $0x80] sm:$0xff]
      %v205 = vld [vmem:[%s176 + $0x88] sm:$0xff]
      %v206 = vld [vmem:[%s176 + $0x90] sm:$0xff]
      %v207 = vld [vmem:[%s176 + $0x98] sm:$0xff]
      %v208 = vld [vmem:[%s176 + $0xa0] sm:$0xff]
      %v209 = vld [vmem:[%s176 + $0xa8] sm:$0xff]
      %v210 = vld [vmem:[%s176 + $0xb0] sm:$0xff]
      %v211 = vld [vmem:[%s176 + $0xb8] sm:$0xff]
      %v212 = vld [vmem:[%s176 + $0xc0] sm:$0xff]
      %v213 = vld [vmem:[%s176 + $0xc8] sm:$0xff]
      %v214 = vld [vmem:[%s176 + $0xd0] sm:$0xff]
      %v215 = vld [vmem:[%s176 + $0xd8] sm:$0xff]
      %v216 = vld [vmem:[%s176 + $0xe0] sm:$0xff]
      %v217 = vld [vmem:[%s176 + $0xe8] sm:$0xff]
      %v218 = vld [vmem:[%s176 + $0xf0] sm:$0xff]
      %v219 = vld [vmem:[%s176 + $0xf8] sm:$0xff]
      %v220 = vld [vmem:[%s176 + $0x100] sm:$0xff]
      %v221 = vld [vmem:[%s176 + $0x108] sm:$0xff]
      %v222 = vld [vmem:[%s176 + $0x110] sm:$0xff]
      %v223 = vld [vmem:[%s176 + $0x118] sm:$0xff]
      %v224 = vld [vmem:[%s176 + $0x120] sm:$0xff]
      %v225 = vld [vmem:[%s176 + $0x128] sm:$0xff]
      %v226 = vld [vmem:[%s176 + $0x130] sm:$0xff]
      %v227 = vld [vmem:[%s176 + $0x138] sm:$0xff]
      %v228 = vld [vmem:[%s176 + $0x140] sm:$0xff]
      %v229 = vld [vmem:[%s176 + $0x148] sm:$0xff]
      %v230 = vld [vmem:[%s176 + $0x150] sm:$0xff]
      %v231 = vld [vmem:[%s176 + $0x158] sm:$0xff]
      %v232 = vld [vmem:[%s176 + $0x160] sm:$0xff]
      %v233 = vld [vmem:[%s176 + $0x168] sm:$0xff]
      %v234 = vld [vmem:[%s176 + $0x170] sm:$0xff]
      %v235 = vld [vmem:[%s176 + $0x178] sm:$0xff]
      %v236 = vld [vmem:[%s176 + $0x180] sm:$0xff]
      %v237 = vld [vmem:[%s176 + $0x188] sm:$0xff]
      %v238 = vld [vmem:[%s176 + $0x190] sm:$0xff]
      %v239 = vld [vmem:[%s176 + $0x198] sm:$0xff]
      %v240 = vld [vmem:[%s176 + $0x1a0] sm:$0xff]
      %v241 = vld [vmem:[%s176 + $0x1a8] sm:$0xff]
      %v242 = vld [vmem:[%s176 + $0x1b0] sm:$0xff]
      %v243 = vld [vmem:[%s176 + $0x1b8] sm:$0xff]
      %v244 = vld [vmem:[%s176 + $0x1c0] sm:$0xff]
      %v245 = vld [vmem:[%s176 + $0x1c8] sm:$0xff]
      %v246 = vld [vmem:[%s176 + $0x1d0] sm:$0xff]
      %v247 = vld [vmem:[%s176 + $0x1d8] sm:$0xff]
      %v248 = vld [vmem:[%s176 + $0x1e0] sm:$0xff]
      %v249 = vld [vmem:[%s176 + $0x1e8] sm:$0xff]
      %v250 = vld [vmem:[%s176 + $0x1f0] sm:$0xff]
      %v251 = vld [vmem:[%s176 + $0x1f8] sm:$0xff]
      %v252 = vld [vmem:[%s176 + $0x200] sm:$0xff]
      %v253 = vld [vmem:[%s176 + $0x208] sm:$0xff]
      %v254 = vld [vmem:[%s176 + $0x210] sm:$0xff]
      %v255 = vld [vmem:[%s176 + $0x218] sm:$0xff]
      %v256 = vld [vmem:[%s176 + $0x220] sm:$0xff]
      %v257 = vld [vmem:[%s176 + $0x228] sm:$0xff]
      %v258 = vld [vmem:[%s176 + $0x230] sm:$0xff]
      %v259 = vld [vmem:[%s176 + $0x238] sm:$0xff]
      %v260 = vld [vmem:[%s176 + $0x240] sm:$0xff]
      %v261 = vld [vmem:[%s176 + $0x248] sm:$0xff]
      %v262 = vld [vmem:[%s176 + $0x250] sm:$0xff]
      %v263 = vld [vmem:[%s176 + $0x258] sm:$0xff]
      %v264 = vld [vmem:[%s176 + $0x260] sm:$0xff]
      %v265 = vld [vmem:[%s176 + $0x268] sm:$0xff]
      %v266 = vld [vmem:[%s176 + $0x270] sm:$0xff]
      %v267 = vld [vmem:[%s176 + $0x278] sm:$0xff]
      %v268 = vld [vmem:[%s176 + $0x280] sm:$0xff]
      %v269 = vld [vmem:[%s176 + $0x288] sm:$0xff]
      %v270 = vld [vmem:[%s176 + $0x290] sm:$0xff]
      %v271 = vld [vmem:[%s176 + $0x298] sm:$0xff]
      %v272 = vld [vmem:[%s176 + $0x2a0] sm:$0xff]
      %v273 = vld [vmem:[%s176 + $0x2a8] sm:$0xff]
      %v274 = vld [vmem:[%s176 + $0x2b0] sm:$0xff]
      %v275 = vld [vmem:[%s176 + $0x2b8] sm:$0xff]
      %v276 = vld [vmem:[%s176 + $0x2c0] sm:$0xff]
      %v277 = vld [vmem:[%s176 + $0x2c8] sm:$0xff]
      %v278 = vld [vmem:[%s176 + $0x2d0] sm:$0xff]
      %v279 = vld [vmem:[%s176 + $0x2d8] sm:$0xff]
      %v280 = vld [vmem:[%s176 + $0x2e0] sm:$0xff]
      %v281 = vld [vmem:[%s176 + $0x2e8] sm:$0xff]
      %v282 = vld [vmem:[%s176 + $0x2f0] sm:$0xff]
      %v283 = vld [vmem:[%s176 + $0x2f8] sm:$0xff]
      %v284 = vld [vmem:[%s176 + $0x300] sm:$0xff]
      %v285 = vld [vmem:[%s176 + $0x308] sm:$0xff]
      %v286 = vld [vmem:[%s176 + $0x310] sm:$0xff]
      %v287 = vld [vmem:[%s176 + $0x318] sm:$0xff]
      %v288 = vld [vmem:[%s176 + $0x320] sm:$0xff]
      %v289 = vld [vmem:[%s176 + $0x328] sm:$0xff]
      %v290 = vld [vmem:[%s176 + $0x330] sm:$0xff]
      %v291 = vld [vmem:[%s176 + $0x338] sm:$0xff]
      %v292 = vld [vmem:[%s176 + $0x340] sm:$0xff]
      %v293 = vld [vmem:[%s176 + $0x348] sm:$0xff]
      %v294 = vld [vmem:[%s176 + $0x350] sm:$0xff]
      %v295 = vld [vmem:[%s176 + $0x358] sm:$0xff]
      %v296 = vld [vmem:[%s176 + $0x360] sm:$0xff]
      %v297 = vld [vmem:[%s176 + $0x368] sm:$0xff]
      %v298 = vld [vmem:[%s176 + $0x370] sm:$0xff]
      %v299 = vld [vmem:[%s176 + $0x378] sm:$0xff]
      %v300 = vld [vmem:[%s176 + $0x380] sm:$0xff]
      %v301 = vld [vmem:[%s176 + $0x388] sm:$0xff]
      %v302 = vld [vmem:[%s176 + $0x390] sm:$0xff]
      %v303 = vld [vmem:[%s176 + $0x398] sm:$0xff]
      %v304 = vld [vmem:[%s176 + $0x3a0] sm:$0xff]
      %v305 = vld [vmem:[%s176 + $0x3a8] sm:$0xff]
      %v306 = vld [vmem:[%s176 + $0x3b0] sm:$0xff]
      %v307 = vld [vmem:[%s176 + $0x3b8] sm:$0xff]
      %v308 = vld [vmem:[%s176 + $0x3c0] sm:$0xff]
      %v309 = vld [vmem:[%s176 + $0x3c8] sm:$0xff]
      %v310 = vld [vmem:[%s176 + $0x3d0] sm:$0xff]
      %v311 = vld [vmem:[%s176 + $0x3d8] sm:$0xff]
      %v312 = vld [vmem:[%s176 + $0x3e0] sm:$0xff]
      %v313 = vld [vmem:[%s176 + $0x3e8] sm:$0xff]
      %v314 = vld [vmem:[%s176 + $0x3f0] sm:$0xff]
      %v315 = vld [vmem:[%s176 + $0x3f8] sm:$0xff]
      %v316 = vpack.c.bf16 %v196, %v188
      %v317 = vpack.c.bf16 %v197, %v189
      %v318 = vpack.c.bf16 %v198, %v190
      %v319 = vpack.c.bf16 %v199, %v191
      %v320 = vpack.c.bf16 %v200, %v192
      %v321 = vpack.c.bf16 %v201, %v193
      %v322 = vpack.c.bf16 %v202, %v194
      %v323 = vpack.c.bf16 %v203, %v195
      %v324 = vpack.c.bf16 %v212, %v204
      %v325 = vpack.c.bf16 %v213, %v205
      %v326 = vpack.c.bf16 %v214, %v206
      %v327 = vpack.c.bf16 %v215, %v207
      %v328 = vpack.c.bf16 %v216, %v208
      %v329 = vpack.c.bf16 %v217, %v209
      %v330 = vpack.c.bf16 %v218, %v210
      %v331 = vpack.c.bf16 %v219, %v211
      %v332 = vpack.c.bf16 %v228, %v220
      %v333 = vpack.c.bf16 %v229, %v221
      %v334 = vpack.c.bf16 %v230, %v222
      %v335 = vpack.c.bf16 %v231, %v223
      %v336 = vpack.c.bf16 %v232, %v224
      %v337 = vpack.c.bf16 %v233, %v225
      %v338 = vpack.c.bf16 %v234, %v226
      %v339 = vpack.c.bf16 %v235, %v227
      %v340 = vpack.c.bf16 %v244, %v236
      %v341 = vpack.c.bf16 %v245, %v237
      %v342 = vpack.c.bf16 %v246, %v238
      %v343 = vpack.c.bf16 %v247, %v239
      %v344 = vpack.c.bf16 %v248, %v240
      %v345 = vpack.c.bf16 %v249, %v241
      %v346 = vpack.c.bf16 %v250, %v242
      %v347 = vpack.c.bf16 %v251, %v243
      %v348 = vpack.c.bf16 %v260, %v252
      %v349 = vpack.c.bf16 %v261, %v253
      %v350 = vpack.c.bf16 %v262, %v254
      %v351 = vpack.c.bf16 %v263, %v255
      %v352 = vpack.c.bf16 %v264, %v256
      %v353 = vpack.c.bf16 %v265, %v257
      %v354 = vpack.c.bf16 %v266, %v258
      %v355 = vpack.c.bf16 %v267, %v259
      %v356 = vpack.c.bf16 %v276, %v268
      %v357 = vpack.c.bf16 %v277, %v269
      %v358 = vpack.c.bf16 %v278, %v270
      %v359 = vpack.c.bf16 %v279, %v271
      %v360 = vpack.c.bf16 %v280, %v272
      %v361 = vpack.c.bf16 %v281, %v273
      %v362 = vpack.c.bf16 %v282, %v274
      %v363 = vpack.c.bf16 %v283, %v275
      %v364 = vpack.c.bf16 %v292, %v284
      %v365 = vpack.c.bf16 %v293, %v285
      %v366 = vpack.c.bf16 %v294, %v286
      %v367 = vpack.c.bf16 %v295, %v287
      %v368 = vpack.c.bf16 %v296, %v288
      %v369 = vpack.c.bf16 %v297, %v289
      %v370 = vpack.c.bf16 %v298, %v290
      %v371 = vpack.c.bf16 %v299, %v291
      %v372 = vpack.c.bf16 %v308, %v300
      %v373 = vpack.c.bf16 %v309, %v301
      %v374 = vpack.c.bf16 %v310, %v302
      %v375 = vpack.c.bf16 %v311, %v303
      %v376 = vpack.c.bf16 %v312, %v304
      %v377 = vpack.c.bf16 %v313, %v305
      %v378 = vpack.c.bf16 %v314, %v306
      %v379 = vpack.c.bf16 %v315, %v307
      %v380 = vld [vmem:[%s1] sm:$0xf]
      %v381 = vld [vmem:[%s1 + $0x4] sm:$0xf]
      %v382 = vld [vmem:[%s1 + $0x8] sm:$0xf]
      %v383 = vld [vmem:[%s1 + $0xc] sm:$0xf]
      %v384 = vld [vmem:[%s1 + $0x10] sm:$0xf]
      %v385 = vld [vmem:[%s1 + $0x14] sm:$0xf]
      %v386 = vld [vmem:[%s1 + $0x18] sm:$0xf]
      %v387 = vld [vmem:[%s1 + $0x1c] sm:$0xf]
      %v388 = vld [vmem:[%s1 + $0x20] sm:$0xf]
      %v389 = vld [vmem:[%s1 + $0x24] sm:$0xf]
      %v390 = vld [vmem:[%s1 + $0x28] sm:$0xf]
      %v391 = vld [vmem:[%s1 + $0x2c] sm:$0xf]
      %v392 = vld [vmem:[%s1 + $0x30] sm:$0xf]
      %v393 = vld [vmem:[%s1 + $0x34] sm:$0xf]
      %v394 = vld [vmem:[%s1 + $0x38] sm:$0xf]
      %v395 = vld [vmem:[%s1 + $0x3c] sm:$0xf]
      %v396 = vld [vmem:[%s1 + $0x40] sm:$0xf]
      %v397 = vld [vmem:[%s1 + $0x44] sm:$0xf]
      %v398 = vld [vmem:[%s1 + $0x48] sm:$0xf]
      %v399 = vld [vmem:[%s1 + $0x4c] sm:$0xf]
      %v400 = vld [vmem:[%s1 + $0x50] sm:$0xf]
      %v401 = vld [vmem:[%s1 + $0x54] sm:$0xf]
      %v402 = vld [vmem:[%s1 + $0x58] sm:$0xf]
      %v403 = vld [vmem:[%s1 + $0x5c] sm:$0xf]
      %v404 = vld [vmem:[%s1 + $0x60] sm:$0xf]
      %v405 = vld [vmem:[%s1 + $0x64] sm:$0xf]
      %v406 = vld [vmem:[%s1 + $0x68] sm:$0xf]
      %v407 = vld [vmem:[%s1 + $0x6c] sm:$0xf]
      %v408 = vld [vmem:[%s1 + $0x70] sm:$0xf]
      %v409 = vld [vmem:[%s1 + $0x74] sm:$0xf]
      %v410 = vld [vmem:[%s1 + $0x78] sm:$0xf]
      %v411 = vld [vmem:[%s1 + $0x7c] sm:$0xf]
      %v412 = vld [vmem:[%s1 + $0x80] sm:$0xf]
      %v413 = vld [vmem:[%s1 + $0x84] sm:$0xf]
      %v414 = vld [vmem:[%s1 + $0x88] sm:$0xf]
      %v415 = vld [vmem:[%s1 + $0x8c] sm:$0xf]
      %v416 = vld [vmem:[%s1 + $0x90] sm:$0xf]
      %v417 = vld [vmem:[%s1 + $0x94] sm:$0xf]
      %v418 = vld [vmem:[%s1 + $0x98] sm:$0xf]
      %v419 = vld [vmem:[%s1 + $0x9c] sm:$0xf]
      %v420 = vld [vmem:[%s1 + $0xa0] sm:$0xf]
      %v421 = vld [vmem:[%s1 + $0xa4] sm:$0xf]
      %v422 = vld [vmem:[%s1 + $0xa8] sm:$0xf]
      %v423 = vld [vmem:[%s1 + $0xac] sm:$0xf]
      %v424 = vld [vmem:[%s1 + $0xb0] sm:$0xf]
      %v425 = vld [vmem:[%s1 + $0xb4] sm:$0xf]
      %v426 = vld [vmem:[%s1 + $0xb8] sm:$0xf]
      %v427 = vld [vmem:[%s1 + $0xbc] sm:$0xf]
      %v428 = vld [vmem:[%s1 + $0xc0] sm:$0xf]
      %v429 = vld [vmem:[%s1 + $0xc4] sm:$0xf]
      %v430 = vld [vmem:[%s1 + $0xc8] sm:$0xf]
      %v431 = vld [vmem:[%s1 + $0xcc] sm:$0xf]
      %v432 = vld [vmem:[%s1 + $0xd0] sm:$0xf]
      %v433 = vld [vmem:[%s1 + $0xd4] sm:$0xf]
      %v434 = vld [vmem:[%s1 + $0xd8] sm:$0xf]
      %v435 = vld [vmem:[%s1 + $0xdc] sm:$0xf]
      %v436 = vld [vmem:[%s1 + $0xe0] sm:$0xf]
      %v437 = vld [vmem:[%s1 + $0xe4] sm:$0xf]
      %v438 = vld [vmem:[%s1 + $0xe8] sm:$0xf]
      %v439 = vld [vmem:[%s1 + $0xec] sm:$0xf]
      %v440 = vld [vmem:[%s1 + $0xf0] sm:$0xf]
      %v441 = vld [vmem:[%s1 + $0xf4] sm:$0xf]
      %v442 = vld [vmem:[%s1 + $0xf8] sm:$0xf]
      %v443 = vld [vmem:[%s1 + $0xfc] sm:$0xf]
      %v444 = vld [vmem:[%s1 + $0x100] sm:$0xf]
      %v445 = vld [vmem:[%s1 + $0x104] sm:$0xf]
      %v446 = vld [vmem:[%s1 + $0x108] sm:$0xf]
      %v447 = vld [vmem:[%s1 + $0x10c] sm:$0xf]
      %v448 = vld [vmem:[%s1 + $0x110] sm:$0xf]
      %v449 = vld [vmem:[%s1 + $0x114] sm:$0xf]
      %v450 = vld [vmem:[%s1 + $0x118] sm:$0xf]
      %v451 = vld [vmem:[%s1 + $0x11c] sm:$0xf]
      %v452 = vld [vmem:[%s1 + $0x120] sm:$0xf]
      %v453 = vld [vmem:[%s1 + $0x124] sm:$0xf]
      %v454 = vld [vmem:[%s1 + $0x128] sm:$0xf]
      %v455 = vld [vmem:[%s1 + $0x12c] sm:$0xf]
      %v456 = vld [vmem:[%s1 + $0x130] sm:$0xf]
      %v457 = vld [vmem:[%s1 + $0x134] sm:$0xf]
      %v458 = vld [vmem:[%s1 + $0x138] sm:$0xf]
      %v459 = vld [vmem:[%s1 + $0x13c] sm:$0xf]
      %v460 = vld [vmem:[%s1 + $0x140] sm:$0xf]
      %v461 = vld [vmem:[%s1 + $0x144] sm:$0xf]
      %v462 = vld [vmem:[%s1 + $0x148] sm:$0xf]
      %v463 = vld [vmem:[%s1 + $0x14c] sm:$0xf]
      %v464 = vld [vmem:[%s1 + $0x150] sm:$0xf]
      %v465 = vld [vmem:[%s1 + $0x154] sm:$0xf]
      %v466 = vld [vmem:[%s1 + $0x158] sm:$0xf]
      %v467 = vld [vmem:[%s1 + $0x15c] sm:$0xf]
      %v468 = vld [vmem:[%s1 + $0x160] sm:$0xf]
      %v469 = vld [vmem:[%s1 + $0x164] sm:$0xf]
      %v470 = vld [vmem:[%s1 + $0x168] sm:$0xf]
      %v471 = vld [vmem:[%s1 + $0x16c] sm:$0xf]
      %v472 = vld [vmem:[%s1 + $0x170] sm:$0xf]
      %v473 = vld [vmem:[%s1 + $0x174] sm:$0xf]
      %v474 = vld [vmem:[%s1 + $0x178] sm:$0xf]
      %v475 = vld [vmem:[%s1 + $0x17c] sm:$0xf]
      %v476 = vld [vmem:[%s1 + $0x180] sm:$0xf]
      %v477 = vld [vmem:[%s1 + $0x184] sm:$0xf]
      %v478 = vld [vmem:[%s1 + $0x188] sm:$0xf]
      %v479 = vld [vmem:[%s1 + $0x18c] sm:$0xf]
      %v480 = vld [vmem:[%s1 + $0x190] sm:$0xf]
      %v481 = vld [vmem:[%s1 + $0x194] sm:$0xf]
      %v482 = vld [vmem:[%s1 + $0x198] sm:$0xf]
      %v483 = vld [vmem:[%s1 + $0x19c] sm:$0xf]
      %v484 = vld [vmem:[%s1 + $0x1a0] sm:$0xf]
      %v485 = vld [vmem:[%s1 + $0x1a4] sm:$0xf]
      %v486 = vld [vmem:[%s1 + $0x1a8] sm:$0xf]
      %v487 = vld [vmem:[%s1 + $0x1ac] sm:$0xf]
      %v488 = vld [vmem:[%s1 + $0x1b0] sm:$0xf]
      %v489 = vld [vmem:[%s1 + $0x1b4] sm:$0xf]
      %v490 = vld [vmem:[%s1 + $0x1b8] sm:$0xf]
      %v491 = vld [vmem:[%s1 + $0x1bc] sm:$0xf]
      %v492 = vld [vmem:[%s1 + $0x1c0] sm:$0xf]
      %v493 = vld [vmem:[%s1 + $0x1c4] sm:$0xf]
      %v494 = vld [vmem:[%s1 + $0x1c8] sm:$0xf]
      %v495 = vld [vmem:[%s1 + $0x1cc] sm:$0xf]
      %v496 = vld [vmem:[%s1 + $0x1d0] sm:$0xf]
      %v497 = vld [vmem:[%s1 + $0x1d4] sm:$0xf]
      %v498 = vld [vmem:[%s1 + $0x1d8] sm:$0xf]
      %v499 = vld [vmem:[%s1 + $0x1dc] sm:$0xf]
      %v500 = vld [vmem:[%s1 + $0x1e0] sm:$0xf]
      %v501 = vld [vmem:[%s1 + $0x1e4] sm:$0xf]
      %v502 = vld [vmem:[%s1 + $0x1e8] sm:$0xf]
      %v503 = vld [vmem:[%s1 + $0x1ec] sm:$0xf]
      %v504 = vld [vmem:[%s1 + $0x1f0] sm:$0xf]
      %v505 = vld [vmem:[%s1 + $0x1f4] sm:$0xf]
      %v506 = vld [vmem:[%s1 + $0x1f8] sm:$0xf]
      %v507 = vld [vmem:[%s1 + $0x1fc] sm:$0xf]
      %v636 = vunpack.c.l.b16 %v380
      %v637 = vunpack.c.l.b16 %v381
      %v638 = vunpack.c.l.b16 %v382
      %v639 = vunpack.c.l.b16 %v383
      %v640 = vunpack.c.l.b16 %v384
      %v641 = vunpack.c.l.b16 %v385
      %v642 = vunpack.c.l.b16 %v386
      %v643 = vunpack.c.l.b16 %v387
      %v644 = vunpack.c.l.b16 %v388
      %v645 = vunpack.c.l.b16 %v389
      %v646 = vunpack.c.l.b16 %v390
      %v647 = vunpack.c.l.b16 %v391
      %v648 = vunpack.c.l.b16 %v392
      %v649 = vunpack.c.l.b16 %v393
      %v650 = vunpack.c.l.b16 %v394
      %v651 = vunpack.c.l.b16 %v395
      %v652 = vunpack.c.l.b16 %v396
      %v653 = vunpack.c.l.b16 %v397
      %v654 = vunpack.c.l.b16 %v398
      %v655 = vunpack.c.l.b16 %v399
      %v656 = vunpack.c.l.b16 %v400
      %v657 = vunpack.c.l.b16 %v401
      %v658 = vunpack.c.l.b16 %v402
      %v659 = vunpack.c.l.b16 %v403
      %v660 = vunpack.c.l.b16 %v404
      %v661 = vunpack.c.l.b16 %v405
      %v662 = vunpack.c.l.b16 %v406
      %v663 = vunpack.c.l.b16 %v407
      %v664 = vunpack.c.l.b16 %v408
      %v665 = vunpack.c.l.b16 %v409
      %v666 = vunpack.c.l.b16 %v410
      %v667 = vunpack.c.l.b16 %v411
      %v668 = vunpack.c.l.b16 %v412
      %v669 = vunpack.c.l.b16 %v413
      %v670 = vunpack.c.l.b16 %v414
      %v671 = vunpack.c.l.b16 %v415
      %v672 = vunpack.c.l.b16 %v416
      %v673 = vunpack.c.l.b16 %v417
      %v674 = vunpack.c.l.b16 %v418
      %v675 = vunpack.c.l.b16 %v419
      %v676 = vunpack.c.l.b16 %v420
      %v677 = vunpack.c.l.b16 %v421
      %v678 = vunpack.c.l.b16 %v422
      %v679 = vunpack.c.l.b16 %v423
      %v680 = vunpack.c.l.b16 %v424
      %v681 = vunpack.c.l.b16 %v425
      %v682 = vunpack.c.l.b16 %v426
      %v683 = vunpack.c.l.b16 %v427
      %v684 = vunpack.c.l.b16 %v428
      %v685 = vunpack.c.l.b16 %v429
      %v686 = vunpack.c.l.b16 %v430
      %v687 = vunpack.c.l.b16 %v431
      %v688 = vunpack.c.l.b16 %v432
      %v689 = vunpack.c.l.b16 %v433
      %v690 = vunpack.c.l.b16 %v434
      %v691 = vunpack.c.l.b16 %v435
      %v692 = vunpack.c.l.b16 %v436
      %v693 = vunpack.c.l.b16 %v437
      %v694 = vunpack.c.l.b16 %v438
      %v695 = vunpack.c.l.b16 %v439
      %v696 = vunpack.c.l.b16 %v440
      %v697 = vunpack.c.l.b16 %v441
      %v698 = vunpack.c.l.b16 %v442
      %v699 = vunpack.c.l.b16 %v443
      %v700 = vunpack.c.l.b16 %v444
      %v701 = vunpack.c.l.b16 %v445
      %v702 = vunpack.c.l.b16 %v446
      %v703 = vunpack.c.l.b16 %v447
      %v704 = vunpack.c.l.b16 %v448
      %v705 = vunpack.c.l.b16 %v449
      %v706 = vunpack.c.l.b16 %v450
      %v707 = vunpack.c.l.b16 %v451
      %v708 = vunpack.c.l.b16 %v452
      %v709 = vunpack.c.l.b16 %v453
      %v710 = vunpack.c.l.b16 %v454
      %v711 = vunpack.c.l.b16 %v455
      %v712 = vunpack.c.l.b16 %v456
      %v713 = vunpack.c.l.b16 %v457
      %v714 = vunpack.c.l.b16 %v458
      %v715 = vunpack.c.l.b16 %v459
      %v716 = vunpack.c.l.b16 %v460
      %v717 = vunpack.c.l.b16 %v461
      %v718 = vunpack.c.l.b16 %v462
      %v719 = vunpack.c.l.b16 %v463
      %v720 = vunpack.c.l.b16 %v464
      %v721 = vunpack.c.l.b16 %v465
      %v722 = vunpack.c.l.b16 %v466
      %v723 = vunpack.c.l.b16 %v467
      %v724 = vunpack.c.l.b16 %v468
      %v725 = vunpack.c.l.b16 %v469
      %v726 = vunpack.c.l.b16 %v470
      %v727 = vunpack.c.l.b16 %v471
      %v728 = vunpack.c.l.b16 %v472
      %v729 = vunpack.c.l.b16 %v473
      %v730 = vunpack.c.l.b16 %v474
      %v731 = vunpack.c.l.b16 %v475
      %v732 = vunpack.c.l.b16 %v476
      %v733 = vunpack.c.l.b16 %v477
      %v734 = vunpack.c.l.b16 %v478
      %v735 = vunpack.c.l.b16 %v479
      %v736 = vunpack.c.l.b16 %v480
      %v737 = vunpack.c.l.b16 %v481
      %v738 = vunpack.c.l.b16 %v482
      %v739 = vunpack.c.l.b16 %v483
      %v740 = vunpack.c.l.b16 %v484
      %v741 = vunpack.c.l.b16 %v485
      %v742 = vunpack.c.l.b16 %v486
      %v743 = vunpack.c.l.b16 %v487
      %v744 = vunpack.c.l.b16 %v488
      %v745 = vunpack.c.l.b16 %v489
      %v746 = vunpack.c.l.b16 %v490
      %v747 = vunpack.c.l.b16 %v491
      %v748 = vunpack.c.l.b16 %v492
      %v749 = vunpack.c.l.b16 %v493
      %v750 = vunpack.c.l.b16 %v494
      %v751 = vunpack.c.l.b16 %v495
      %v752 = vunpack.c.l.b16 %v496
      %v753 = vunpack.c.l.b16 %v497
      %v754 = vunpack.c.l.b16 %v498
      %v755 = vunpack.c.l.b16 %v499
      %v756 = vunpack.c.l.b16 %v500
      %v757 = vunpack.c.l.b16 %v501
      %v758 = vunpack.c.l.b16 %v502
      %v759 = vunpack.c.l.b16 %v503
      %v760 = vunpack.c.l.b16 %v504
      %v761 = vunpack.c.l.b16 %v505
      %v762 = vunpack.c.l.b16 %v506
      %v763 = vunpack.c.l.b16 %v507
      %v764 = vpack.c.b16 %v637, %v636
      %v765 = vpack.c.b16 %v639, %v638
      %v766 = vpack.c.b16 %v641, %v640
      %v767 = vpack.c.b16 %v643, %v642
      %v768 = vpack.c.b16 %v645, %v644
      %v769 = vpack.c.b16 %v647, %v646
      %v770 = vpack.c.b16 %v649, %v648
      %v771 = vpack.c.b16 %v651, %v650
      %v772 = vpack.c.b16 %v653, %v652
      %v773 = vpack.c.b16 %v655, %v654
      %v774 = vpack.c.b16 %v657, %v656
      %v775 = vpack.c.b16 %v659, %v658
      %v776 = vpack.c.b16 %v661, %v660
      %v777 = vpack.c.b16 %v663, %v662
      %v778 = vpack.c.b16 %v665, %v664
      %v779 = vpack.c.b16 %v667, %v666
      %v780 = vpack.c.b16 %v669, %v668
      %v781 = vpack.c.b16 %v671, %v670
      %v782 = vpack.c.b16 %v673, %v672
      %v783 = vpack.c.b16 %v675, %v674
      %v784 = vpack.c.b16 %v677, %v676
      %v785 = vpack.c.b16 %v679, %v678
      %v786 = vpack.c.b16 %v681, %v680
      %v787 = vpack.c.b16 %v683, %v682
      %v788 = vpack.c.b16 %v685, %v684
      %v789 = vpack.c.b16 %v687, %v686
      %v790 = vpack.c.b16 %v689, %v688
      %v791 = vpack.c.b16 %v691, %v690
      %v792 = vpack.c.b16 %v693, %v692
      %v793 = vpack.c.b16 %v695, %v694
      %v794 = vpack.c.b16 %v697, %v696
      %v795 = vpack.c.b16 %v699, %v698
      %v796 = vpack.c.b16 %v701, %v700
      %v797 = vpack.c.b16 %v703, %v702
      %v798 = vpack.c.b16 %v705, %v704
      %v799 = vpack.c.b16 %v707, %v706
      %v800 = vpack.c.b16 %v709, %v708
      %v801 = vpack.c.b16 %v711, %v710
      %v802 = vpack.c.b16 %v713, %v712
      %v803 = vpack.c.b16 %v715, %v714
      %v804 = vpack.c.b16 %v717, %v716
      %v805 = vpack.c.b16 %v719, %v718
      %v806 = vpack.c.b16 %v721, %v720
      %v807 = vpack.c.b16 %v723, %v722
      %v808 = vpack.c.b16 %v725, %v724
      %v809 = vpack.c.b16 %v727, %v726
      %v810 = vpack.c.b16 %v729, %v728
      %v811 = vpack.c.b16 %v731, %v730
      %v812 = vpack.c.b16 %v733, %v732
      %v813 = vpack.c.b16 %v735, %v734
      %v814 = vpack.c.b16 %v737, %v736
      %v815 = vpack.c.b16 %v739, %v738
      %v816 = vpack.c.b16 %v741, %v740
      %v817 = vpack.c.b16 %v743, %v742
      %v818 = vpack.c.b16 %v745, %v744
      %v819 = vpack.c.b16 %v747, %v746
      %v820 = vpack.c.b16 %v749, %v748
      %v821 = vpack.c.b16 %v751, %v750
      %v822 = vpack.c.b16 %v753, %v752
      %v823 = vpack.c.b16 %v755, %v754
      %v824 = vpack.c.b16 %v757, %v756
      %v825 = vpack.c.b16 %v759, %v758
      %v826 = vpack.c.b16 %v761, %v760
      %v827 = vpack.c.b16 %v763, %v762
      %892 = vmatpush.bf16.msra.mxu0 %v771
      %893 = vmatpush.bf16.msra.mxu0 %v770
      %894 = vmatpush.bf16.msra.mxu0 %v769
      %895 = vmatpush.bf16.msra.mxu0 %v768
      %896 = vmatpush.bf16.msra.mxu0 %v767
      %897 = vmatpush.bf16.msra.mxu0 %v766
      %898 = vmatpush.bf16.msra.mxu0 %v765
      %899 = vmatpush.bf16.msra.mxu0 %v764
      %900 = vmatmul.bf16.gmra.mxu0 %v316
      %v901 = vpop.f32.mrf.mxu0
      %v902 = vadd.f32 0.0, %v901
      %v903 = vpop.f32.mrf.mxu0
      %v904 = vadd.f32 0.0, %v903
      %905 = vmatmul.bf16.gmra.mxu0 %v324
      %v906 = vpop.f32.mrf.mxu0
      %v907 = vadd.f32 0.0, %v906
      %v908 = vpop.f32.mrf.mxu0
      %v909 = vadd.f32 0.0, %v908
      %910 = vmatmul.bf16.gmra.mxu0 %v332
      %v911 = vpop.f32.mrf.mxu0
      %v912 = vadd.f32 0.0, %v911
      %v913 = vpop.f32.mrf.mxu0
      %v914 = vadd.f32 0.0, %v913
      %915 = vmatmul.bf16.gmra.mxu0 %v340
      %v916 = vpop.f32.mrf.mxu0
      %v917 = vadd.f32 0.0, %v916
      %v918 = vpop.f32.mrf.mxu0
      %v919 = vadd.f32 0.0, %v918
      %920 = vmatmul.bf16.gmra.mxu0 %v348
      %v921 = vpop.f32.mrf.mxu0
      %v922 = vadd.f32 0.0, %v921
      %v923 = vpop.f32.mrf.mxu0
      %v924 = vadd.f32 0.0, %v923
      %925 = vmatmul.bf16.gmra.mxu0 %v356
      %v926 = vpop.f32.mrf.mxu0
      %v927 = vadd.f32 0.0, %v926
      %v928 = vpop.f32.mrf.mxu0
      %v929 = vadd.f32 0.0, %v928
      %930 = vmatmul.bf16.gmra.mxu0 %v364
      %v931 = vpop.f32.mrf.mxu0
      %v932 = vadd.f32 0.0, %v931
      %v933 = vpop.f32.mrf.mxu0
      %v934 = vadd.f32 0.0, %v933
      %935 = vmatmul.bf16.gmra.mxu0 %v372
      %v936 = vpop.f32.mrf.mxu0
      %v937 = vadd.f32 0.0, %v936
      %v938 = vpop.f32.mrf.mxu0
      %v939 = vadd.f32 0.0, %v938
      %940 = vdwg.mxu0
      %941 = vmatpush.bf16.msra.mxu0 %v779
      %942 = vmatpush.bf16.msra.mxu0 %v778
      %943 = vmatpush.bf16.msra.mxu0 %v777
      %944 = vmatpush.bf16.msra.mxu0 %v776
      %945 = vmatpush.bf16.msra.mxu0 %v775
      %946 = vmatpush.bf16.msra.mxu0 %v774
      %947 = vmatpush.bf16.msra.mxu0 %v773
      %948 = vmatpush.bf16.msra.mxu0 %v772
      %949 = vmatmul.bf16.gmra.mxu0 %v317
      %v950 = vpop.f32.mrf.mxu0
      %v951 = vadd.f32 %v902, %v950
      %v952 = vpop.f32.mrf.mxu0
      %v953 = vadd.f32 %v904, %v952
      %954 = vmatmul.bf16.gmra.mxu0 %v325
      %v955 = vpop.f32.mrf.mxu0
      %v956 = vadd.f32 %v907, %v955
      %v957 = vpop.f32.mrf.mxu0
      %v958 = vadd.f32 %v909, %v957
      %959 = vmatmul.bf16.gmra.mxu0 %v333
      %v960 = vpop.f32.mrf.mxu0
      %v961 = vadd.f32 %v912, %v960
      %v962 = vpop.f32.mrf.mxu0
      %v963 = vadd.f32 %v914, %v962
      %964 = vmatmul.bf16.gmra.mxu0 %v341
      %v965 = vpop.f32.mrf.mxu0
      %v966 = vadd.f32 %v917, %v965
      %v967 = vpop.f32.mrf.mxu0
      %v968 = vadd.f32 %v919, %v967
      %969 = vmatmul.bf16.gmra.mxu0 %v349
      %v970 = vpop.f32.mrf.mxu0
      %v971 = vadd.f32 %v922, %v970
      %v972 = vpop.f32.mrf.mxu0
      %v973 = vadd.f32 %v924, %v972
      %974 = vmatmul.bf16.gmra.mxu0 %v357
      %v975 = vpop.f32.mrf.mxu0
      %v976 = vadd.f32 %v927, %v975
      %v977 = vpop.f32.mrf.mxu0
      %v978 = vadd.f32 %v929, %v977
      %979 = vmatmul.bf16.gmra.mxu0 %v365
      %v980 = vpop.f32.mrf.mxu0
      %v981 = vadd.f32 %v932, %v980
      %v982 = vpop.f32.mrf.mxu0
      %v983 = vadd.f32 %v934, %v982
      %984 = vmatmul.bf16.gmra.mxu0 %v373
      %v985 = vpop.f32.mrf.mxu0
      %v986 = vadd.f32 %v937, %v985
      %v987 = vpop.f32.mrf.mxu0
      %v988 = vadd.f32 %v939, %v987
      %989 = vdwg.mxu0
      %990 = vmatpush.bf16.msra.mxu0 %v787
      %991 = vmatpush.bf16.msra.mxu0 %v786
      %992 = vmatpush.bf16.msra.mxu0 %v785
      %993 = vmatpush.bf16.msra.mxu0 %v784
      %994 = vmatpush.bf16.msra.mxu0 %v783
      %995 = vmatpush.bf16.msra.mxu0 %v782
      %996 = vmatpush.bf16.msra.mxu0 %v781
      %997 = vmatpush.bf16.msra.mxu0 %v780
      %998 = vmatmul.bf16.gmra.mxu0 %v318
      %v999 = vpop.f32.mrf.mxu0
      %v1000 = vadd.f32 %v951, %v999
      %v1001 = vpop.f32.mrf.mxu0
      %v1002 = vadd.f32 %v953, %v1001
      %1003 = vmatmul.bf16.gmra.mxu0 %v326
      %v1004 = vpop.f32.mrf.mxu0
      %v1005 = vadd.f32 %v956, %v1004
      %v1006 = vpop.f32.mrf.mxu0
      %v1007 = vadd.f32 %v958, %v1006
      %1008 = vmatmul.bf16.gmra.mxu0 %v334
      %v1009 = vpop.f32.mrf.mxu0
      %v1010 = vadd.f32 %v961, %v1009
      %v1011 = vpop.f32.mrf.mxu0
      %v1012 = vadd.f32 %v963, %v1011
      %1013 = vmatmul.bf16.gmra.mxu0 %v342
      %v1014 = vpop.f32.mrf.mxu0
      %v1015 = vadd.f32 %v966, %v1014
      %v1016 = vpop.f32.mrf.mxu0
      %v1017 = vadd.f32 %v968, %v1016
      %1018 = vmatmul.bf16.gmra.mxu0 %v350
      %v1019 = vpop.f32.mrf.mxu0
      %v1020 = vadd.f32 %v971, %v1019
      %v1021 = vpop.f32.mrf.mxu0
      %v1022 = vadd.f32 %v973, %v1021
      %1023 = vmatmul.bf16.gmra.mxu0 %v358
      %v1024 = vpop.f32.mrf.mxu0
      %v1025 = vadd.f32 %v976, %v1024
      %v1026 = vpop.f32.mrf.mxu0
      %v1027 = vadd.f32 %v978, %v1026
      %1028 = vmatmul.bf16.gmra.mxu0 %v366
      %v1029 = vpop.f32.mrf.mxu0
      %v1030 = vadd.f32 %v981, %v1029
      %v1031 = vpop.f32.mrf.mxu0
      %v1032 = vadd.f32 %v983, %v1031
      %1033 = vmatmul.bf16.gmra.mxu0 %v374
      %v1034 = vpop.f32.mrf.mxu0
      %v1035 = vadd.f32 %v986, %v1034
      %v1036 = vpop.f32.mrf.mxu0
      %v1037 = vadd.f32 %v988, %v1036
      %1038 = vdwg.mxu0
      %1039 = vmatpush.bf16.msra.mxu0 %v795
      %1040 = vmatpush.bf16.msra.mxu0 %v794
      %1041 = vmatpush.bf16.msra.mxu0 %v793
      %1042 = vmatpush.bf16.msra.mxu0 %v792
      %1043 = vmatpush.bf16.msra.mxu0 %v791
      %1044 = vmatpush.bf16.msra.mxu0 %v790
      %1045 = vmatpush.bf16.msra.mxu0 %v789
      %1046 = vmatpush.bf16.msra.mxu0 %v788
      %1047 = vmatmul.bf16.gmra.mxu0 %v319
      %v1048 = vpop.f32.mrf.mxu0
      %v1049 = vadd.f32 %v1000, %v1048
      %v1050 = vpop.f32.mrf.mxu0
      %v1051 = vadd.f32 %v1002, %v1050
      %1052 = vmatmul.bf16.gmra.mxu0 %v327
      %v1053 = vpop.f32.mrf.mxu0
      %v1054 = vadd.f32 %v1005, %v1053
      %v1055 = vpop.f32.mrf.mxu0
      %v1056 = vadd.f32 %v1007, %v1055
      %1057 = vmatmul.bf16.gmra.mxu0 %v335
      %v1058 = vpop.f32.mrf.mxu0
      %v1059 = vadd.f32 %v1010, %v1058
      %v1060 = vpop.f32.mrf.mxu0
      %v1061 = vadd.f32 %v1012, %v1060
      %1062 = vmatmul.bf16.gmra.mxu0 %v343
      %v1063 = vpop.f32.mrf.mxu0
      %v1064 = vadd.f32 %v1015, %v1063
      %v1065 = vpop.f32.mrf.mxu0
      %v1066 = vadd.f32 %v1017, %v1065
      %1067 = vmatmul.bf16.gmra.mxu0 %v351
      %v1068 = vpop.f32.mrf.mxu0
      %v1069 = vadd.f32 %v1020, %v1068
      %v1070 = vpop.f32.mrf.mxu0
      %v1071 = vadd.f32 %v1022, %v1070
      %1072 = vmatmul.bf16.gmra.mxu0 %v359
      %v1073 = vpop.f32.mrf.mxu0
      %v1074 = vadd.f32 %v1025, %v1073
      %v1075 = vpop.f32.mrf.mxu0
      %v1076 = vadd.f32 %v1027, %v1075
      %1077 = vmatmul.bf16.gmra.mxu0 %v367
      %v1078 = vpop.f32.mrf.mxu0
      %v1079 = vadd.f32 %v1030, %v1078
      %v1080 = vpop.f32.mrf.mxu0
      %v1081 = vadd.f32 %v1032, %v1080
      %1082 = vmatmul.bf16.gmra.mxu0 %v375
      %v1083 = vpop.f32.mrf.mxu0
      %v1084 = vadd.f32 %v1035, %v1083
      %v1085 = vpop.f32.mrf.mxu0
      %v1086 = vadd.f32 %v1037, %v1085
      %1087 = vdwg.mxu0
      %1088 = vmatpush.bf16.msra.mxu0 %v803
      %1089 = vmatpush.bf16.msra.mxu0 %v802
      %1090 = vmatpush.bf16.msra.mxu0 %v801
      %1091 = vmatpush.bf16.msra.mxu0 %v800
      %1092 = vmatpush.bf16.msra.mxu0 %v799
      %1093 = vmatpush.bf16.msra.mxu0 %v798
      %1094 = vmatpush.bf16.msra.mxu0 %v797
      %1095 = vmatpush.bf16.msra.mxu0 %v796
      %1096 = vmatmul.bf16.gmra.mxu0 %v320
      %v1097 = vpop.f32.mrf.mxu0
      %v1098 = vadd.f32 %v1049, %v1097
      %v1099 = vpop.f32.mrf.mxu0
      %v1100 = vadd.f32 %v1051, %v1099
      %1101 = vmatmul.bf16.gmra.mxu0 %v328
      %v1102 = vpop.f32.mrf.mxu0
      %v1103 = vadd.f32 %v1054, %v1102
      %v1104 = vpop.f32.mrf.mxu0
      %v1105 = vadd.f32 %v1056, %v1104
      %1106 = vmatmul.bf16.gmra.mxu0 %v336
      %v1107 = vpop.f32.mrf.mxu0
      %v1108 = vadd.f32 %v1059, %v1107
      %v1109 = vpop.f32.mrf.mxu0
      %v1110 = vadd.f32 %v1061, %v1109
      %1111 = vmatmul.bf16.gmra.mxu0 %v344
      %v1112 = vpop.f32.mrf.mxu0
      %v1113 = vadd.f32 %v1064, %v1112
      %v1114 = vpop.f32.mrf.mxu0
      %v1115 = vadd.f32 %v1066, %v1114
      %1116 = vmatmul.bf16.gmra.mxu0 %v352
      %v1117 = vpop.f32.mrf.mxu0
      %v1118 = vadd.f32 %v1069, %v1117
      %v1119 = vpop.f32.mrf.mxu0
      %v1120 = vadd.f32 %v1071, %v1119
      %1121 = vmatmul.bf16.gmra.mxu0 %v360
      %v1122 = vpop.f32.mrf.mxu0
      %v1123 = vadd.f32 %v1074, %v1122
      %v1124 = vpop.f32.mrf.mxu0
      %v1125 = vadd.f32 %v1076, %v1124
      %1126 = vmatmul.bf16.gmra.mxu0 %v368
      %v1127 = vpop.f32.mrf.mxu0
      %v1128 = vadd.f32 %v1079, %v1127
      %v1129 = vpop.f32.mrf.mxu0
      %v1130 = vadd.f32 %v1081, %v1129
      %1131 = vmatmul.bf16.gmra.mxu0 %v376
      %v1132 = vpop.f32.mrf.mxu0
      %v1133 = vadd.f32 %v1084, %v1132
      %v1134 = vpop.f32.mrf.mxu0
      %v1135 = vadd.f32 %v1086, %v1134
      %1136 = vdwg.mxu0
      %1137 = vmatpush.bf16.msra.mxu0 %v811
      %1138 = vmatpush.bf16.msra.mxu0 %v810
      %1139 = vmatpush.bf16.msra.mxu0 %v809
      %1140 = vmatpush.bf16.msra.mxu0 %v808
      %1141 = vmatpush.bf16.msra.mxu0 %v807
      %1142 = vmatpush.bf16.msra.mxu0 %v806
      %1143 = vmatpush.bf16.msra.mxu0 %v805
      %1144 = vmatpush.bf16.msra.mxu0 %v804
      %1145 = vmatmul.bf16.gmra.mxu0 %v321
      %v1146 = vpop.f32.mrf.mxu0
      %v1147 = vadd.f32 %v1098, %v1146
      %v1148 = vpop.f32.mrf.mxu0
      %v1149 = vadd.f32 %v1100, %v1148
      %1150 = vmatmul.bf16.gmra.mxu0 %v329
      %v1151 = vpop.f32.mrf.mxu0
      %v1152 = vadd.f32 %v1103, %v1151
      %v1153 = vpop.f32.mrf.mxu0
      %v1154 = vadd.f32 %v1105, %v1153
      %1155 = vmatmul.bf16.gmra.mxu0 %v337
      %v1156 = vpop.f32.mrf.mxu0
      %v1157 = vadd.f32 %v1108, %v1156
      %v1158 = vpop.f32.mrf.mxu0
      %v1159 = vadd.f32 %v1110, %v1158
      %1160 = vmatmul.bf16.gmra.mxu0 %v345
      %v1161 = vpop.f32.mrf.mxu0
      %v1162 = vadd.f32 %v1113, %v1161
      %v1163 = vpop.f32.mrf.mxu0
      %v1164 = vadd.f32 %v1115, %v1163
      %1165 = vmatmul.bf16.gmra.mxu0 %v353
      %v1166 = vpop.f32.mrf.mxu0
      %v1167 = vadd.f32 %v1118, %v1166
      %v1168 = vpop.f32.mrf.mxu0
      %v1169 = vadd.f32 %v1120, %v1168
      %1170 = vmatmul.bf16.gmra.mxu0 %v361
      %v1171 = vpop.f32.mrf.mxu0
      %v1172 = vadd.f32 %v1123, %v1171
      %v1173 = vpop.f32.mrf.mxu0
      %v1174 = vadd.f32 %v1125, %v1173
      %1175 = vmatmul.bf16.gmra.mxu0 %v369
      %v1176 = vpop.f32.mrf.mxu0
      %v1177 = vadd.f32 %v1128, %v1176
      %v1178 = vpop.f32.mrf.mxu0
      %v1179 = vadd.f32 %v1130, %v1178
      %1180 = vmatmul.bf16.gmra.mxu0 %v377
      %v1181 = vpop.f32.mrf.mxu0
      %v1182 = vadd.f32 %v1133, %v1181
      %v1183 = vpop.f32.mrf.mxu0
      %v1184 = vadd.f32 %v1135, %v1183
      %1185 = vdwg.mxu0
      %1186 = vmatpush.bf16.msra.mxu0 %v819
      %1187 = vmatpush.bf16.msra.mxu0 %v818
      %1188 = vmatpush.bf16.msra.mxu0 %v817
      %1189 = vmatpush.bf16.msra.mxu0 %v816
      %1190 = vmatpush.bf16.msra.mxu0 %v815
      %1191 = vmatpush.bf16.msra.mxu0 %v814
      %1192 = vmatpush.bf16.msra.mxu0 %v813
      %1193 = vmatpush.bf16.msra.mxu0 %v812
      %1194 = vmatmul.bf16.gmra.mxu0 %v322
      %v1195 = vpop.f32.mrf.mxu0
      %v1196 = vadd.f32 %v1147, %v1195
      %v1197 = vpop.f32.mrf.mxu0
      %v1198 = vadd.f32 %v1149, %v1197
      %1199 = vmatmul.bf16.gmra.mxu0 %v330
      %v1200 = vpop.f32.mrf.mxu0
      %v1201 = vadd.f32 %v1152, %v1200
      %v1202 = vpop.f32.mrf.mxu0
      %v1203 = vadd.f32 %v1154, %v1202
      %1204 = vmatmul.bf16.gmra.mxu0 %v338
      %v1205 = vpop.f32.mrf.mxu0
      %v1206 = vadd.f32 %v1157, %v1205
      %v1207 = vpop.f32.mrf.mxu0
      %v1208 = vadd.f32 %v1159, %v1207
      %1209 = vmatmul.bf16.gmra.mxu0 %v346
      %v1210 = vpop.f32.mrf.mxu0
      %v1211 = vadd.f32 %v1162, %v1210
      %v1212 = vpop.f32.mrf.mxu0
      %v1213 = vadd.f32 %v1164, %v1212
      %1214 = vmatmul.bf16.gmra.mxu0 %v354
      %v1215 = vpop.f32.mrf.mxu0
      %v1216 = vadd.f32 %v1167, %v1215
      %v1217 = vpop.f32.mrf.mxu0
      %v1218 = vadd.f32 %v1169, %v1217
      %1219 = vmatmul.bf16.gmra.mxu0 %v362
      %v1220 = vpop.f32.mrf.mxu0
      %v1221 = vadd.f32 %v1172, %v1220
      %v1222 = vpop.f32.mrf.mxu0
      %v1223 = vadd.f32 %v1174, %v1222
      %1224 = vmatmul.bf16.gmra.mxu0 %v370
      %v1225 = vpop.f32.mrf.mxu0
      %v1226 = vadd.f32 %v1177, %v1225
      %v1227 = vpop.f32.mrf.mxu0
      %v1228 = vadd.f32 %v1179, %v1227
      %1229 = vmatmul.bf16.gmra.mxu0 %v378
      %v1230 = vpop.f32.mrf.mxu0
      %v1231 = vadd.f32 %v1182, %v1230
      %v1232 = vpop.f32.mrf.mxu0
      %v1233 = vadd.f32 %v1184, %v1232
      %1234 = vdwg.mxu0
      %1235 = vmatpush.bf16.msra.mxu0 %v827
      %1236 = vmatpush.bf16.msra.mxu0 %v826
      %1237 = vmatpush.bf16.msra.mxu0 %v825
      %1238 = vmatpush.bf16.msra.mxu0 %v824
      %1239 = vmatpush.bf16.msra.mxu0 %v823
      %1240 = vmatpush.bf16.msra.mxu0 %v822
      %1241 = vmatpush.bf16.msra.mxu0 %v821
      %1242 = vmatpush.bf16.msra.mxu0 %v820
      %1243 = vmatmul.bf16.gmra.mxu0 %v323
      %v1244 = vpop.f32.mrf.mxu0
      %v1245 = vadd.f32 %v1196, %v1244
      %v1246 = vpop.f32.mrf.mxu0
      %v1247 = vadd.f32 %v1198, %v1246
      %1248 = vmatmul.bf16.gmra.mxu0 %v331
      %v1249 = vpop.f32.mrf.mxu0
      %v1250 = vadd.f32 %v1201, %v1249
      %v1251 = vpop.f32.mrf.mxu0
      %v1252 = vadd.f32 %v1203, %v1251
      %1253 = vmatmul.bf16.gmra.mxu0 %v339
      %v1254 = vpop.f32.mrf.mxu0
      %v1255 = vadd.f32 %v1206, %v1254
      %v1256 = vpop.f32.mrf.mxu0
      %v1257 = vadd.f32 %v1208, %v1256
      %1258 = vmatmul.bf16.gmra.mxu0 %v347
      %v1259 = vpop.f32.mrf.mxu0
      %v1260 = vadd.f32 %v1211, %v1259
      %v1261 = vpop.f32.mrf.mxu0
      %v1262 = vadd.f32 %v1213, %v1261
      %1263 = vmatmul.bf16.gmra.mxu0 %v355
      %v1264 = vpop.f32.mrf.mxu0
      %v1265 = vadd.f32 %v1216, %v1264
      %v1266 = vpop.f32.mrf.mxu0
      %v1267 = vadd.f32 %v1218, %v1266
      %1268 = vmatmul.bf16.gmra.mxu0 %v363
      %v1269 = vpop.f32.mrf.mxu0
      %v1270 = vadd.f32 %v1221, %v1269
      %v1271 = vpop.f32.mrf.mxu0
      %v1272 = vadd.f32 %v1223, %v1271
      %1273 = vmatmul.bf16.gmra.mxu0 %v371
      %v1274 = vpop.f32.mrf.mxu0
      %v1275 = vadd.f32 %v1226, %v1274
      %v1276 = vpop.f32.mrf.mxu0
      %v1277 = vadd.f32 %v1228, %v1276
      %1278 = vmatmul.bf16.gmra.mxu0 %v379
      %v1279 = vpop.f32.mrf.mxu0
      %v1280 = vadd.f32 %v1231, %v1279
      %v1281 = vpop.f32.mrf.mxu0
      %v1282 = vadd.f32 %v1233, %v1281
      %1283 = vdwg.mxu0
      %1284 = vst [vmem:[%s182] sm:$0xff] %v1245
      %1285 = vst [vmem:[%s182 + $0x8] sm:$0xff] %v1247
      %1286 = vst [vmem:[%s182 + $0x10] sm:$0xff] %v1250
      %1287 = vst [vmem:[%s182 + $0x18] sm:$0xff] %v1252
      %1288 = vst [vmem:[%s182 + $0x20] sm:$0xff] %v1255
      %1289 = vst [vmem:[%s182 + $0x28] sm:$0xff] %v1257
      %1290 = vst [vmem:[%s182 + $0x30] sm:$0xff] %v1260
      %1291 = vst [vmem:[%s182 + $0x38] sm:$0xff] %v1262
      %1292 = vst [vmem:[%s182 + $0x40] sm:$0xff] %v1265
      %1293 = vst [vmem:[%s182 + $0x48] sm:$0xff] %v1267
      %1294 = vst [vmem:[%s182 + $0x50] sm:$0xff] %v1270
      %1295 = vst [vmem:[%s182 + $0x58] sm:$0xff] %v1272
      %1296 = vst [vmem:[%s182 + $0x60] sm:$0xff] %v1275
      %1297 = vst [vmem:[%s182 + $0x68] sm:$0xff] %v1277
      %1298 = vst [vmem:[%s182 + $0x70] sm:$0xff] %v1280
      %1299 = vst [vmem:[%s182 + $0x78] sm:$0xff] %v1282
      %v1300 = vadd.f32 %v1245, %v1247
      %v1301 = vadd.f32 %v1300, %v1250
      %v1302 = vadd.f32 %v1301, %v1252
      %v1303 = vadd.f32 %v1302, %v1255
      %v1304 = vadd.f32 %v1303, %v1257
      %v1305 = vadd.f32 %v1304, %v1260
      %v1306 = vadd.f32 %v1305, %v1262
      %v1307 = vadd.f32 %v1306, %v1265
      %v1308 = vadd.f32 %v1307, %v1267
      %v1309 = vadd.f32 %v1308, %v1270
      %v1310 = vadd.f32 %v1309, %v1272
      %v1311 = vadd.f32 %v1310, %v1275
      %v1312 = vadd.f32 %v1311, %v1277
      %v1313 = vadd.f32 %v1312, %v1280
      %v1314 = vadd.f32 %v1313, %v1282
      %v1315 = vrot.slane %v1314, 4
      %v1316 = vadd.f32 %v1314, %v1315
      %v1317 = vrot.slane %v1316, 2
      %v1318 = vadd.f32 %v1316, %v1317
      %v1319 = vrot.slane %v1318, 1
      %v1320 = vadd.f32 %v1318, %v1319
      %v1321 = vmul.f32 %v1245, %v1245
      %v1322 = vmul.f32 %v1247, %v1247
      %v1323 = vmul.f32 %v1250, %v1250
      %v1324 = vmul.f32 %v1252, %v1252
      %v1325 = vmul.f32 %v1255, %v1255
      %v1326 = vmul.f32 %v1257, %v1257
      %v1327 = vmul.f32 %v1260, %v1260
      %v1328 = vmul.f32 %v1262, %v1262
      %v1329 = vmul.f32 %v1265, %v1265
      %v1330 = vmul.f32 %v1267, %v1267
      %v1331 = vmul.f32 %v1270, %v1270
      %v1332 = vmul.f32 %v1272, %v1272
      %v1333 = vmul.f32 %v1275, %v1275
      %v1334 = vmul.f32 %v1277, %v1277
      %v1335 = vmul.f32 %v1280, %v1280
      %v1336 = vmul.f32 %v1282, %v1282
      %v1337 = vadd.f32 %v1321, %v1322
      %v1338 = vadd.f32 %v1337, %v1323
      %v1339 = vadd.f32 %v1338, %v1324
      %v1340 = vadd.f32 %v1339, %v1325
      %v1341 = vadd.f32 %v1340, %v1326
      %v1342 = vadd.f32 %v1341, %v1327
      %v1343 = vadd.f32 %v1342, %v1328
      %v1344 = vadd.f32 %v1343, %v1329
      %v1345 = vadd.f32 %v1344, %v1330
      %v1346 = vadd.f32 %v1345, %v1331
      %v1347 = vadd.f32 %v1346, %v1332
      %v1348 = vadd.f32 %v1347, %v1333
      %v1349 = vadd.f32 %v1348, %v1334
      %v1350 = vadd.f32 %v1349, %v1335
      %v1351 = vadd.f32 %v1350, %v1336
      %v1352 = vrot.slane %v1351, 4
      %v1353 = vadd.f32 %v1351, %v1352
      %v1354 = vrot.slane %v1353, 2
      %v1355 = vadd.f32 %v1353, %v1354
      %v1356 = vrot.slane %v1355, 1
      %v1357 = vadd.f32 %v1355, %v1356
      %vm1358 = vcmask 1040384
      %v1359 = vsel %vm1358, %v1320, %v1357
      %1360 = vst [vmem:[%s187] sm:$0x3] %v1359
      %s1361 = smul.u32 16, %s15
      %p1362 = scmp.lt.s32.totalorder %s1361, 31
      %s1363 = scalar_select %p1362, %s1361, 31
      %s1364 = smul.addr %s1363, 8
      %s1365 = scalar_lea.vmem %s2, %s1364
      %p1366 = scmp.lt.s32.totalorder %s15, 1
      %s1367 = scalar_select %p1366, %s15, 1
      %s1368 = smul.addr %s1367, 2
      %s1369 = scalar_lea.vmem %s3, %s1368
      // Predicated region
      $region29: #{qnet_categorical_forward.2} parent=27 // pred_check
        %p1370 = pneg %p80
      $region30: #{qnet_categorical_forward.2} parent=27 // pred_check_branch
        %1372 = sbr.rel (%p1370) target = $region32
      $region31: #{qnet_categorical_forward.2} parent=27 // pred_region
        %s1373 = smul.u32 16, %s15
      $region32: #{qnet_categorical_forward.2} parent=27 // pred_fallthru
        _
      // Predicated region
      $region33: #{qnet_categorical_forward.2} parent=27 // pred_check
        %p1374 = pneg %p106
      $region34: #{qnet_categorical_forward.2} parent=27 // pred_check_branch
        %1376 = sbr.rel (%p1374) target = $region36
      $region35: #{qnet_categorical_forward.2} parent=27 // pred_region
        _
      $region36: #{qnet_categorical_forward.2} parent=27 // pred_fallthru
        _
    $region28: #{qnet_categorical_forward.2} parent=5 // pred_fallthru
      _
    %p1377 = scmp.le.s32.totalorder 2, %s10
    // Predicated region
    $region37: #{qnet_categorical_forward.2} parent=5 // pred_check
      %p1378 = pneg %p1377
    $region38: #{qnet_categorical_forward.2} parent=5 // pred_check_branch
      %1380 = sbr.rel (%p1378) target = $region40
    $region39: #{qnet_categorical_forward.2} parent=5 // pred_region
      %s1381 = ssub.s32 %s10, 2
      // Predicated region
      $region41: #{qnet_categorical_forward.2} parent=39 // pred_check
        %p1382 = pneg %p86
      $region42: #{qnet_categorical_forward.2} parent=39 // pred_check_branch
        %1384 = sbr.rel (%p1382) target = $region44
      $region43: #{qnet_categorical_forward.2} parent=39 // pred_region
        %s1385 = smul.u32 16, %s16
        %p1386 = scmp.lt.s32.totalorder %s1385, 31
        %s1387 = scalar_select %p1386, %s1385, 31
        %s1388 = smul.addr %s1387, 8
        %s1389 = scalar_lea.vmem %s2, %s1388
      $region44: #{qnet_categorical_forward.2} parent=39 // pred_fallthru
        _
      // Predicated region
      $region45: #{qnet_categorical_forward.2} parent=39 // pred_check
        %p1390 = pneg %p112
      $region46: #{qnet_categorical_forward.2} parent=39 // pred_check_branch
        %1392 = sbr.rel (%p1390) target = $region48
      $region47: #{qnet_categorical_forward.2} parent=39 // pred_region
        %p1393 = scmp.lt.s32.totalorder %s16, 1
        %s1394 = scalar_select %p1393, %s16, 1
        %s1395 = smul.addr %s1394, 2
        %s1396 = scalar_lea.vmem %s3, %s1395
      $region48: #{qnet_categorical_forward.2} parent=39 // pred_fallthru
        _
    $region40: #{qnet_categorical_forward.2} parent=5 // pred_fallthru
      _
  $region6: #{qnet_categorical_forward.2} parent=0 // loop_footer
    %s14 = sadd.s32 1, %s10
  $region7: #{qnet_categorical_forward.2} parent=0 // loop_footer_branch
    %9 = sbr.rel target = $region3
  $region8: #{qnet_categorical_forward.2} parent=0 // loop_exit
    _

</llo_original>
